<compile_context>
chip_gen: v7x
topology: tpu7x:2x2x1
jax: 0.10.0
libtpu: 0.0.40
codegen_flags: <defaults>
</compile_context>

<pallas_src>
import functools

import jax
import jax.numpy as jnp
from jax.experimental import pallas as pl
from jax.experimental.pallas import tpu as pltpu

LOG_STD_MAX = 2.0
LOG_STD_MIN = -5.0


def _actor_kernel(x_ref, wx_ref, bias_ref, wg_ref, wout_ref,
                  mean_ref, logstd_ref, *, ins, ctx_dim, h1, h2, act_dim,
                  act_at_end):
    x = x_ref[...]                                   # [TB, obs] f32 (ctx = last ctx_dim cols)
    xb = x.astype(jnp.bfloat16)
    b_all = bias_ref[...]                            # [1, H1 + H2 + 2A] f32
    nxh = h1 + h2

    # Fused x-side matmul: cols [:H1] = trunk layer-1 pre-activation,
    # cols [H1:] = per-sample generated bias (context rows only, via zero padding).
    t = jnp.dot(xb, wx_ref[...],
                preferred_element_type=jnp.float32) + b_all[:, :nxh]
    h = jnp.maximum(t[:, :h1], 0.0)                  # ReLU body output   [TB, H1]
    pb = t[:, h1:]                                   # generated bias     [TB, H2]

    # Factored hypernet head (contract H1 on the MXU first):
    #   g[:, c*H2 + o]       = h @ Whw[c, :, o]      (context-modulated part)
    #   g[:, C*H2 + o]       = h @ reshape(bhw)[:,o] (context-independent part)
    g = jnp.dot(h.astype(jnp.bfloat16), wg_ref[...],
                preferred_element_type=jnp.float32)  # [TB, (C+1)*H2]

    feats = g[:, ctx_dim * h2:] + pb
    for c in range(ctx_dim):                         # static unroll, ctx_dim is tiny
        feats = feats + x[:, ins + c:ins + c + 1] * g[:, c * h2:(c + 1) * h2]

    if act_at_end:
        feats = jnp.maximum(feats, 0.0)

    # Fused fc_mean / fc_logstd heads.
    out = jnp.dot(feats.astype(jnp.bfloat16), wout_ref[...],
                  preferred_element_type=jnp.float32) + b_all[:, nxh:]
    mean_ref[...] = out[:, :act_dim]
    ls = jnp.tanh(out[:, act_dim:])
    logstd_ref[...] = LOG_STD_MIN + 0.5 * (LOG_STD_MAX - LOG_STD_MIN) * (ls + 1.0)


def actor_adapter_features_forward(x, packed, *, context_dim, h1, h2, act_dim,
                                   act_at_end=False, block_b=256):
    """x: [B, obs_dim] (last context_dim columns are the context)."""
    wx, bias_all, wg, wout = packed
    B, obs = x.shape
    ins = obs - context_dim
    tb = B if B <= block_b else block_b              # (8,128) rule: tb==B or tb%8==0
    grid = (pl.cdiv(B, tb),)

    kern = functools.partial(_actor_kernel, ins=ins, ctx_dim=context_dim,
                             h1=h1, h2=h2, act_dim=act_dim,
                             act_at_end=act_at_end)

    def resident(arr):                               # weights stay VMEM-resident
        return pl.BlockSpec(arr.shape, lambda i: (0, 0))

    flops = (2 * B * (obs * (h1 + h2) + h1 * (context_dim + 1) * h2
                      + h2 * 2 * act_dim) + 2 * B * context_dim * h2)
    bytes_accessed = (4 * B * obs + 2 * (wx.size + wg.size + wout.size)
                      + 4 * bias_all.size + 4 * 2 * B * act_dim)

    mean, log_std = pl.pallas_call(
        kern,
        grid=grid,
        in_specs=[
            pl.BlockSpec((tb, obs), lambda i: (i, 0)),
            resident(wx), resident(bias_all), resident(wg), resident(wout),
        ],
        out_specs=[
            pl.BlockSpec((tb, act_dim), lambda i: (i, 0)),
            pl.BlockSpec((tb, act_dim), lambda i: (i, 0)),
        ],
        out_shape=[
            jax.ShapeDtypeStruct((B, act_dim), jnp.float32),
            jax.ShapeDtypeStruct((B, act_dim), jnp.float32),
        ],
        compiler_params=pltpu.CompilerParams(
            dimension_semantics=("parallel",),
            vmem_limit_bytes=32 * 1024 * 1024,
        ),
        cost_estimate=pl.CostEstimate(
            flops=flops, transcendentals=B * act_dim,
            bytes_accessed=bytes_accessed),
    )(x, wx, bias_all, wg, wout)
    return mean, log_std


# ----------------------------- parameters ----------------------------------

def init_natural_params(key, ins, context_dim, h1, h2, act_dim):
    """PyTorch-style uniform(-1/sqrt(fan_in), 1/sqrt(fan_in)) init."""
    ks = jax.random.split(key, 10)

    def lin(kw, kb, fan_in, fan_out):
        bound = 1.0 / jnp.sqrt(jnp.float32(fan_in))
        w = jax.random.uniform(kw, (fan_in, fan_out), jnp.float32, -bound, bound)
        b = jax.random.uniform(kb, (fan_out,), jnp.float32, -bound, bound)
        return w, b

    w1, b1 = lin(ks[0], ks[1], ins, h1)                   # trunk body layer
    whw, bhw = lin(ks[2], ks[3], context_dim, h1 * h2)    # hypernet -> weights
    whb, bhb = lin(ks[4], ks[5], context_dim, h2)         # hypernet -> bias
    wm, bm = lin(ks[6], ks[7], h2, act_dim)               # fc_mean
    ws, bs = lin(ks[8], ks[9], h2, act_dim)               # fc_logstd
    return dict(w1=w1, b1=b1, whw=whw, bhw=bhw, whb=whb, bhb=bhb,
                wm=wm, bm=bm, ws=ws, bs=bs)


def pack_params(p, *, ins, context_dim, h1, h2, act_dim):
    """One-time packing into the kernel's fused bf16 layout (done at init, not per call)."""
    obs = ins + context_dim
    wx = jnp.zeros((obs, h1 + h2), jnp.float32)
    wx = wx.at[:ins, :h1].set(p["w1"])                    # feature rows -> trunk layer 1
    wx = wx.at[ins:, h1:].set(p["whb"])                   # context rows -> generated bias

    # wg[i, c*H2 + o] = Whw[c, i*H2 + o];  wg[i, C*H2 + o] = bhw[i*H2 + o]
    wg_left = (p["whw"].reshape(context_dim, h1, h2)
               .transpose(1, 0, 2).reshape(h1, context_dim * h2))
    wg = jnp.concatenate([wg_left, p["bhw"].reshape(h1, h2)], axis=1)

    wout = jnp.concatenate([p["wm"], p["ws"]], axis=1)
    bias_all = jnp.concatenate([p["b1"], p["bhb"], p["bm"], p["bs"]])[None, :]
    return (wx.astype(jnp.bfloat16), bias_all.astype(jnp.float32),
            wg.astype(jnp.bfloat16), wout.astype(jnp.bfloat16))


# ----------------------------- reference ------------------------------------

def reference_forward(x, p, *, context_dim, h1, h2, act_dim, act_at_end=False):
    """Natural (un-factored) formulation with the same bf16 cast points."""
    bf = lambda a: a.astype(jnp.bfloat16).astype(jnp.float32)
    ins = x.shape[1] - context_dim
    xf, ctx = x[:, :ins], x[:, ins:]
    with jax.default_matmul_precision("highest"):
        hb = jnp.maximum(jnp.dot(bf(xf), bf(p["w1"])) + p["b1"], 0.0)
        pb = jnp.dot(bf(ctx), bf(p["whb"])) + p["bhb"]
        wgen = (jnp.einsum("bc,cio->bio", ctx,
                           bf(p["whw"]).reshape(context_dim, h1, h2))
                + bf(p["bhw"]).reshape(h1, h2)[None])
        feats = jnp.einsum("bi,bio->bo", bf(hb), wgen) + pb
        if act_at_end:
            feats = jnp.maximum(feats, 0.0)
        mean = jnp.dot(bf(feats), bf(p["wm"])) + p["bm"]
        log_std = jnp.tanh(jnp.dot(bf(feats), bf(p["ws"])) + p["bs"])
    log_std = LOG_STD_MIN + 0.5 * (LOG_STD_MAX - LOG_STD_MIN) * (log_std + 1.0)
    return mean, log_std


if __name__ == "__main__":
    B = 512
    context_dim = 4
    ins = 16                         # obs_dim - context_dim
    obs_dim = ins + context_dim
    net_arch = [32, 32]              # only len(net_arch)==2 is modeled here
    h1, h2 = net_arch
    act_dim = 4

    key = jax.random.PRNGKey(0)
    kx, kp = jax.random.split(key)
    x = jax.random.normal(kx, (B, obs_dim), jnp.float32)
    nat = init_natural_params(kp, ins, context_dim, h1, h2, act_dim)
    packed = pack_params(nat, ins=ins, context_dim=context_dim,
                         h1=h1, h2=h2, act_dim=act_dim)

    fwd = jax.jit(functools.partial(
        actor_adapter_features_forward, context_dim=context_dim,
        h1=h1, h2=h2, act_dim=act_dim, act_at_end=False, block_b=256))

    mean, log_std = fwd(x, packed)
    jax.block_until_ready((mean, log_std))

    mean_ref, log_std_ref = reference_forward(
        x, nat, context_dim=context_dim, h1=h1, h2=h2, act_dim=act_dim)

    assert mean.shape == (B, act_dim) and log_std.shape == (B, act_dim)
    assert jnp.allclose(mean, mean_ref, atol=2e-3, rtol=2e-3), \
        float(jnp.max(jnp.abs(mean - mean_ref)))
    assert jnp.allclose(log_std, log_std_ref, atol=2e-3, rtol=2e-3), \
        float(jnp.max(jnp.abs(log_std - log_std_ref)))
    print("KERNEL_OK")
</pallas_src>

<mosaic_0001>
module attributes {stable_mosaic.version = 11 : i64} {
  func.func @_actor_kernel(%arg0: i32, %arg1: memref<256x20xf32, #tpu.memory_space<vmem>>, %arg2: memref<20x64xbf16, #tpu.memory_space<vmem>>, %arg3: memref<1x72xf32, #tpu.memory_space<vmem>>, %arg4: memref<32x160xbf16, #tpu.memory_space<vmem>>, %arg5: memref<32x8xbf16, #tpu.memory_space<vmem>>, %arg6: memref<256x4xf32, #tpu.memory_space<vmem>>, %arg7: memref<256x4xf32, #tpu.memory_space<vmem>>) attributes {dimension_semantics = [#tpu.dimension_semantics<parallel>], iteration_bounds = array<i64: 2>, scalar_prefetch = 0 : i64, scratch_operands = 0 : i64, tpu.core_type = #tpu.core_type<tc>, window_params = [{transform_indices = @transform_0, window_bounds = array<i64: 256, 20>}, {pipeline_mode = #tpu.pipeline_mode<synchronous>, transform_indices = @transform_1, window_bounds = array<i64: 20, 64>}, {pipeline_mode = #tpu.pipeline_mode<synchronous>, transform_indices = @transform_2, window_bounds = array<i64: 1, 72>}, {pipeline_mode = #tpu.pipeline_mode<synchronous>, transform_indices = @transform_3, window_bounds = array<i64: 32, 160>}, {pipeline_mode = #tpu.pipeline_mode<synchronous>, transform_indices = @transform_4, window_bounds = array<i64: 32, 8>}, {transform_indices = @transform_5, window_bounds = array<i64: 256, 4>}, {transform_indices = @transform_6, window_bounds = array<i64: 256, 4>}]} {
    %c0 = arith.constant 0 : index
    %c0_0 = arith.constant 0 : index
    %0 = vector.load %arg1[%c0, %c0_0] : memref<256x20xf32, #tpu.memory_space<vmem>>, vector<256x20xf32>
    %1 = arith.truncf %0 : vector<256x20xf32> to vector<256x20xbf16>
    %c0_1 = arith.constant 0 : index
    %c0_2 = arith.constant 0 : index
    %2 = vector.load %arg3[%c0_1, %c0_2] : memref<1x72xf32, #tpu.memory_space<vmem>>, vector<1x72xf32>
    %c0_3 = arith.constant 0 : index
    %c0_4 = arith.constant 0 : index
    %3 = vector.load %arg2[%c0_3, %c0_4] : memref<20x64xbf16, #tpu.memory_space<vmem>>, vector<20x64xbf16>
    %cst = arith.constant dense<0.000000e+00> : vector<256x64xf32>
    %4 = tpu.matmul %1, %3, %cst {dimension_numbers = #tpu.dot_dimension_numbers<[1], [0], [0], [1], [0, 0, 1, 1], [], []>} : vector<256x20xbf16>, vector<20x64xbf16>, vector<256x64xf32> -> vector<256x64xf32>
    %5 = vector.extract_strided_slice %2 {offsets = [0, 0], sizes = [1, 64], strides = [1, 1]} : vector<1x72xf32> to vector<1x64xf32>
    %6 = vector.broadcast %5 : vector<1x64xf32> to vector<256x64xf32>
    %7 = arith.addf %4, %6 : vector<256x64xf32>
    %8 = vector.extract_strided_slice %7 {offsets = [0, 0], sizes = [256, 32], strides = [1, 1]} : vector<256x64xf32> to vector<256x32xf32>
    %cst_5 = arith.constant 0.000000e+00 : f32
    %9 = vector.broadcast %cst_5 : f32 to vector<256x32xf32>
    %10 = arith.maximumf %8, %9 : vector<256x32xf32>
    %11 = vector.extract_strided_slice %7 {offsets = [0, 32], sizes = [256, 32], strides = [1, 1]} : vector<256x64xf32> to vector<256x32xf32>
    %12 = arith.truncf %10 : vector<256x32xf32> to vector<256x32xbf16>
    %c0_6 = arith.constant 0 : index
    %c0_7 = arith.constant 0 : index
    %13 = vector.load %arg4[%c0_6, %c0_7] : memref<32x160xbf16, #tpu.memory_space<vmem>>, vector<32x160xbf16>
    %cst_8 = arith.constant dense<0.000000e+00> : vector<256x160xf32>
    %14 = tpu.matmul %12, %13, %cst_8 {dimension_numbers = #tpu.dot_dimension_numbers<[1], [0], [0], [1], [0, 0, 1, 1], [], []>} : vector<256x32xbf16>, vector<32x160xbf16>, vector<256x160xf32> -> vector<256x160xf32>
    %15 = vector.extract_strided_slice %14 {offsets = [0, 128], sizes = [256, 32], strides = [1, 1]} : vector<256x160xf32> to vector<256x32xf32>
    %16 = arith.addf %15, %11 : vector<256x32xf32>
    %17 = vector.extract_strided_slice %0 {offsets = [0, 16], sizes = [256, 1], strides = [1, 1]} : vector<256x20xf32> to vector<256x1xf32>
    %18 = vector.extract_strided_slice %14 {offsets = [0, 0], sizes = [256, 32], strides = [1, 1]} : vector<256x160xf32> to vector<256x32xf32>
    %19 = vector.broadcast %17 : vector<256x1xf32> to vector<256x32xf32>
    %20 = arith.mulf %19, %18 : vector<256x32xf32>
    %21 = arith.addf %16, %20 : vector<256x32xf32>
    %22 = vector.extract_strided_slice %0 {offsets = [0, 17], sizes = [256, 1], strides = [1, 1]} : vector<256x20xf32> to vector<256x1xf32>
    %23 = vector.extract_strided_slice %14 {offsets = [0, 32], sizes = [256, 32], strides = [1, 1]} : vector<256x160xf32> to vector<256x32xf32>
    %24 = vector.broadcast %22 : vector<256x1xf32> to vector<256x32xf32>
    %25 = arith.mulf %24, %23 : vector<256x32xf32>
    %26 = arith.addf %21, %25 : vector<256x32xf32>
    %27 = vector.extract_strided_slice %0 {offsets = [0, 18], sizes = [256, 1], strides = [1, 1]} : vector<256x20xf32> to vector<256x1xf32>
    %28 = vector.extract_strided_slice %14 {offsets = [0, 64], sizes = [256, 32], strides = [1, 1]} : vector<256x160xf32> to vector<256x32xf32>
    %29 = vector.broadcast %27 : vector<256x1xf32> to vector<256x32xf32>
    %30 = arith.mulf %29, %28 : vector<256x32xf32>
    %31 = arith.addf %26, %30 : vector<256x32xf32>
    %32 = vector.extract_strided_slice %0 {offsets = [0, 19], sizes = [256, 1], strides = [1, 1]} : vector<256x20xf32> to vector<256x1xf32>
    %33 = vector.extract_strided_slice %14 {offsets = [0, 96], sizes = [256, 32], strides = [1, 1]} : vector<256x160xf32> to vector<256x32xf32>
    %34 = vector.broadcast %32 : vector<256x1xf32> to vector<256x32xf32>
    %35 = arith.mulf %34, %33 : vector<256x32xf32>
    %36 = arith.addf %31, %35 : vector<256x32xf32>
    %37 = arith.truncf %36 : vector<256x32xf32> to vector<256x32xbf16>
    %c0_9 = arith.constant 0 : index
    %c0_10 = arith.constant 0 : index
    %38 = vector.load %arg5[%c0_9, %c0_10] : memref<32x8xbf16, #tpu.memory_space<vmem>>, vector<32x8xbf16>
    %cst_11 = arith.constant dense<0.000000e+00> : vector<256x8xf32>
    %39 = tpu.matmul %37, %38, %cst_11 {dimension_numbers = #tpu.dot_dimension_numbers<[1], [0], [0], [1], [0, 0, 1, 1], [], []>} : vector<256x32xbf16>, vector<32x8xbf16>, vector<256x8xf32> -> vector<256x8xf32>
    %40 = vector.extract_strided_slice %2 {offsets = [0, 64], sizes = [1, 8], strides = [1, 1]} : vector<1x72xf32> to vector<1x8xf32>
    %41 = vector.broadcast %40 : vector<1x8xf32> to vector<256x8xf32>
    %42 = arith.addf %39, %41 : vector<256x8xf32>
    %43 = vector.extract_strided_slice %42 {offsets = [0, 0], sizes = [256, 4], strides = [1, 1]} : vector<256x8xf32> to vector<256x4xf32>
    %c0_12 = arith.constant 0 : index
    %c0_13 = arith.constant 0 : index
    %44 = vector.load %arg6[%c0_12, %c0_13] : memref<256x4xf32, #tpu.memory_space<vmem>>, vector<256x4xf32>
    tpu.vector_store %arg6[%c0_12, %c0_13], %43 {strides = array<i32>} : memref<256x4xf32, #tpu.memory_space<vmem>>, vector<256x4xf32>,
    %45 = vector.extract_strided_slice %42 {offsets = [0, 4], sizes = [256, 4], strides = [1, 1]} : vector<256x8xf32> to vector<256x4xf32>
    %46 = math.tanh %45 : vector<256x4xf32>
    %cst_14 = arith.constant 1.000000e+00 : f32
    %47 = vector.broadcast %cst_14 : f32 to vector<256x4xf32>
    %48 = arith.addf %46, %47 : vector<256x4xf32>
    %cst_15 = arith.constant 3.500000e+00 : f32
    %49 = vector.broadcast %cst_15 : f32 to vector<256x4xf32>
    %50 = arith.mulf %49, %48 : vector<256x4xf32>
    %cst_16 = arith.constant -5.000000e+00 : f32
    %51 = vector.broadcast %cst_16 : f32 to vector<256x4xf32>
    %52 = arith.addf %51, %50 : vector<256x4xf32>
    %c0_17 = arith.constant 0 : index
    %c0_18 = arith.constant 0 : index
    %53 = vector.load %arg7[%c0_17, %c0_18] : memref<256x4xf32, #tpu.memory_space<vmem>>, vector<256x4xf32>
    tpu.vector_store %arg7[%c0_17, %c0_18], %52 {strides = array<i32>} : memref<256x4xf32, #tpu.memory_space<vmem>>, vector<256x4xf32>,
    return
  }
  func.func @transform_0(%arg0: i32) -> (i32, i32) {
    %c0_i32 = arith.constant 0 : i32
    %c0_i32_0 = arith.constant 0 : i32
    return %arg0, %c0_i32 : i32, i32
  }
  func.func @transform_1(%arg0: i32) -> (i32, i32) {
    %c0_i32 = arith.constant 0 : i32
    %c0_i32_0 = arith.constant 0 : i32
    %c0_i32_1 = arith.constant 0 : i32
    return %c0_i32, %c0_i32_0 : i32, i32
  }
  func.func @transform_2(%arg0: i32) -> (i32, i32) {
    %c0_i32 = arith.constant 0 : i32
    %c0_i32_0 = arith.constant 0 : i32
    %c0_i32_1 = arith.constant 0 : i32
    return %c0_i32, %c0_i32_0 : i32, i32
  }
  func.func @transform_3(%arg0: i32) -> (i32, i32) {
    %c0_i32 = arith.constant 0 : i32
    %c0_i32_0 = arith.constant 0 : i32
    %c0_i32_1 = arith.constant 0 : i32
    return %c0_i32, %c0_i32_0 : i32, i32
  }
  func.func @transform_4(%arg0: i32) -> (i32, i32) {
    %c0_i32 = arith.constant 0 : i32
    %c0_i32_0 = arith.constant 0 : i32
    %c0_i32_1 = arith.constant 0 : i32
    return %c0_i32, %c0_i32_0 : i32, i32
  }
  func.func @transform_5(%arg0: i32) -> (i32, i32) {
    %c0_i32 = arith.constant 0 : i32
    %c0_i32_0 = arith.constant 0 : i32
    return %arg0, %c0_i32 : i32, i32
  }
  func.func @transform_6(%arg0: i32) -> (i32, i32) {
    %c0_i32 = arith.constant 0 : i32
    %c0_i32_0 = arith.constant 0 : i32
    return %arg0, %c0_i32 : i32, i32
  }
}

</mosaic_0001>

<llo_original>
// kernel: actor_adapter_features_forward.1
$region0: #{actor_adapter_features_forward.1}
  #allocation0 [shape = 'u32[]', space=smem, size = 0x4, offset = 0x4, fixed_abs, tag = 'smem constant byte address 0x4 - core index']
  #allocation1 [shape = 'u32[144,128]{1,0:T(1,128)}', space=vmem, size = 0x12000, scoped, tag = 'internal scratch']
  %s0 = inlined_call_operand.vmem [shape: f32[512,20], index: 0, kind: input, shape index: {}]
  %s1 = inlined_call_operand.vmem [shape: bf16[20,64], index: 1, kind: input, shape index: {}]
  %s2 = inlined_call_operand.vmem [shape: f32[1,72], index: 2, kind: input, shape index: {}]
  %s3 = inlined_call_operand.vmem [shape: bf16[32,160], index: 3, kind: input, shape index: {}]
  %s4 = inlined_call_operand.vmem [shape: bf16[32,8], index: 4, kind: input, shape index: {}]
  %s5 = inlined_call_operand.vmem [shape: f32[512,4], index: 5, kind: output, shape index: {0}]
  %s6 = inlined_call_operand.vmem [shape: f32[512,4], index: 6, kind: output, shape index: {1}]
  %7 = xla_tuple %s5, %s6
  %s8 = sld [smem:[#allocation0]]
  $region61: #{actor_adapter_features_forward.1} parent=0
    _
  %s10 = ssub.s32 1, %s8
  %s11 = scalar_select 0, %s10, %s8
  loop: start=0, step=1, limit=4
  $region2: #{actor_adapter_features_forward.1} parent=0 // loop_pre_header
    _
  $region3: #{actor_adapter_features_forward.1} parent=0 // loop_header
    %s13 = sphi 0, %s17
    %p14 = scmp.ge.s32.totalorder %s13, 4
    %s23 = sphi 0, %s25
    %s26 = sphi 0, %s23
    %s27 = sphi 0, %s26
    %s43 = sphi 0, %s27
    %s47 = sphi 0, %s47
    %s49 = sphi 0, %s47
    %s50 = sphi 0, %s49
    %s64 = sphi 0, %s50
    %s68 = sphi 0, %s68
    %s70 = sphi 0, %s68
    %s71 = sphi 0, %s70
    %s85 = sphi 0, %s71
    %s89 = sphi 0, %s89
    %s91 = sphi 0, %s89
    %s92 = sphi 0, %s91
    %s106 = sphi 0, %s92
    %s110 = sphi 0, %s110
    %s112 = sphi 0, %s110
    %s113 = sphi 0, %s112
    %s127 = sphi 0, %s113
    %s133 = sphi 0, %s135
    %s136 = sphi 0, %s133
    %s137 = sphi 0, %s136
    %s153 = sphi 0, %s137
    %s159 = sphi 0, %s161
    %s162 = sphi 0, %s159
    %s163 = sphi 0, %s162
    %s179 = sphi 0, %s163
  $region4: #{actor_adapter_features_forward.1} parent=0 // loop_header_branch
    %16 = sbr.rel (%p14) target = $region8
  $region5: #{actor_adapter_features_forward.1} parent=0 // loop_body
    %s18 = ssub.s32 %s13, 1
    %s19 = ssub.s32 %s13, 2
    %s20 = sadd.s32 %s13, 1
    %s21 = ssub.s32 %s13, %s20
    %p22 = scmp.eq.s32.totalorder %s21, 0
    %s24 = sadd.s32 %s23, 1
    %s25 = scalar_select %p22, %s23, %s24
    %p28 = pneg %p22
    %p29 = scmp.eq.s32.totalorder %s13, 1
    %p30 = por %p28, %p29
    %p31 = scmp.ne.s32.totalorder %s23, %s26
    %p32 = scmp.eq.s32.totalorder %s13, 0
    %p33 = por %p31, %p32
    %p34 = scmp.ne.s32.totalorder %s23, %s26
    %p35 = scmp.eq.s32.totalorder %s18, 1
    %p36 = por %p34, %p35
    %p37 = scmp.ne.s32.totalorder %s26, %s27
    %p38 = scmp.eq.s32.totalorder %s18, 0
    %p39 = por %p37, %p38
    %p40 = scmp.ne.s32.totalorder %s26, %s27
    %p41 = scmp.eq.s32.totalorder %s19, 1
    %p42 = por %p40, %p41
    %p44 = scmp.ne.s32.totalorder %s27, %s43
    %p45 = scmp.eq.s32.totalorder %s19, 0
    %p46 = por %p44, %p45
    %s48 = sadd.s32 %s47, 1
    %p51 = scmp.eq.s32.totalorder %s13, 1
    %p52 = scmp.ne.s32.totalorder %s47, %s49
    %p53 = scmp.eq.s32.totalorder %s13, 0
    %p54 = por %p52, %p53
    %p55 = scmp.ne.s32.totalorder %s47, %s49
    %p56 = scmp.eq.s32.totalorder %s18, 1
    %p57 = por %p55, %p56
    %p58 = scmp.ne.s32.totalorder %s49, %s50
    %p59 = scmp.eq.s32.totalorder %s18, 0
    %p60 = por %p58, %p59
    %p61 = scmp.ne.s32.totalorder %s49, %s50
    %p62 = scmp.eq.s32.totalorder %s19, 1
    %p63 = por %p61, %p62
    %p65 = scmp.ne.s32.totalorder %s50, %s64
    %p66 = scmp.eq.s32.totalorder %s19, 0
    %p67 = por %p65, %p66
    %s69 = sadd.s32 %s68, 1
    %p72 = scmp.eq.s32.totalorder %s13, 1
    %p73 = scmp.ne.s32.totalorder %s68, %s70
    %p74 = scmp.eq.s32.totalorder %s13, 0
    %p75 = por %p73, %p74
    %p76 = scmp.ne.s32.totalorder %s68, %s70
    %p77 = scmp.eq.s32.totalorder %s18, 1
    %p78 = por %p76, %p77
    %p79 = scmp.ne.s32.totalorder %s70, %s71
    %p80 = scmp.eq.s32.totalorder %s18, 0
    %p81 = por %p79, %p80
    %p82 = scmp.ne.s32.totalorder %s70, %s71
    %p83 = scmp.eq.s32.totalorder %s19, 1
    %p84 = por %p82, %p83
    %p86 = scmp.ne.s32.totalorder %s71, %s85
    %p87 = scmp.eq.s32.totalorder %s19, 0
    %p88 = por %p86, %p87
    %s90 = sadd.s32 %s89, 1
    %p93 = scmp.eq.s32.totalorder %s13, 1
    %p94 = scmp.ne.s32.totalorder %s89, %s91
    %p95 = scmp.eq.s32.totalorder %s13, 0
    %p96 = por %p94, %p95
    %p97 = scmp.ne.s32.totalorder %s89, %s91
    %p98 = scmp.eq.s32.totalorder %s18, 1
    %p99 = por %p97, %p98
    %p100 = scmp.ne.s32.totalorder %s91, %s92
    %p101 = scmp.eq.s32.totalorder %s18, 0
    %p102 = por %p100, %p101
    %p103 = scmp.ne.s32.totalorder %s91, %s92
    %p104 = scmp.eq.s32.totalorder %s19, 1
    %p105 = por %p103, %p104
    %p107 = scmp.ne.s32.totalorder %s92, %s106
    %p108 = scmp.eq.s32.totalorder %s19, 0
    %p109 = por %p107, %p108
    %s111 = sadd.s32 %s110, 1
    %p114 = scmp.eq.s32.totalorder %s13, 1
    %p115 = scmp.ne.s32.totalorder %s110, %s112
    %p116 = scmp.eq.s32.totalorder %s13, 0
    %p117 = por %p115, %p116
    %p118 = scmp.ne.s32.totalorder %s110, %s112
    %p119 = scmp.eq.s32.totalorder %s18, 1
    %p120 = por %p118, %p119
    %p121 = scmp.ne.s32.totalorder %s112, %s113
    %p122 = scmp.eq.s32.totalorder %s18, 0
    %p123 = por %p121, %p122
    %p124 = scmp.ne.s32.totalorder %s112, %s113
    %p125 = scmp.eq.s32.totalorder %s19, 1
    %p126 = por %p124, %p125
    %p128 = scmp.ne.s32.totalorder %s113, %s127
    %p129 = scmp.eq.s32.totalorder %s19, 0
    %p130 = por %p128, %p129
    %s131 = ssub.s32 %s13, %s20
    %p132 = scmp.eq.s32.totalorder %s131, 0
    %s134 = sadd.s32 %s133, 1
    %s135 = scalar_select %p132, %s133, %s134
    %p138 = pneg %p132
    %p139 = scmp.eq.s32.totalorder %s13, 1
    %p140 = por %p138, %p139
    %p141 = scmp.ne.s32.totalorder %s133, %s136
    %p142 = scmp.eq.s32.totalorder %s13, 0
    %p143 = por %p141, %p142
    %p144 = scmp.ne.s32.totalorder %s133, %s136
    %p145 = scmp.eq.s32.totalorder %s18, 1
    %p146 = por %p144, %p145
    %p147 = scmp.ne.s32.totalorder %s136, %s137
    %p148 = scmp.eq.s32.totalorder %s18, 0
    %p149 = por %p147, %p148
    %p150 = scmp.ne.s32.totalorder %s136, %s137
    %p151 = scmp.eq.s32.totalorder %s19, 1
    %p152 = por %p150, %p151
    %p154 = scmp.ne.s32.totalorder %s137, %s153
    %p155 = scmp.eq.s32.totalorder %s19, 0
    %p156 = por %p154, %p155
    %s157 = ssub.s32 %s13, %s20
    %p158 = scmp.eq.s32.totalorder %s157, 0
    %s160 = sadd.s32 %s159, 1
    %s161 = scalar_select %p158, %s159, %s160
    %p164 = pneg %p158
    %p165 = scmp.eq.s32.totalorder %s13, 1
    %p166 = por %p164, %p165
    %p167 = scmp.ne.s32.totalorder %s159, %s162
    %p168 = scmp.eq.s32.totalorder %s13, 0
    %p169 = por %p167, %p168
    %p170 = scmp.ne.s32.totalorder %s159, %s162
    %p171 = scmp.eq.s32.totalorder %s18, 1
    %p172 = por %p170, %p171
    %p173 = scmp.ne.s32.totalorder %s162, %s163
    %p174 = scmp.eq.s32.totalorder %s18, 0
    %p175 = por %p173, %p174
    %p176 = scmp.ne.s32.totalorder %s162, %s163
    %p177 = scmp.eq.s32.totalorder %s19, 1
    %p178 = por %p176, %p177
    %p180 = scmp.ne.s32.totalorder %s163, %s179
    %p181 = scmp.eq.s32.totalorder %s19, 0
    %p182 = por %p180, %p181
    %p183 = scmp.le.s32.totalorder 1, %s13
    %p184 = scmp.lt.s32.totalorder %s13, 3
    %p185 = pnand %p183, %p184
    %p186 = pneg %p185
    // Predicated region
    $region9: #{actor_adapter_features_forward.1} parent=5 // pred_check
      _
    $region10: #{actor_adapter_features_forward.1} parent=5 // pred_check_branch
      %188 = sbr.rel (%p185) target = $region12
    $region11: #{actor_adapter_features_forward.1} parent=5 // pred_region
      %s189 = ssub.s32 %s13, 1
      // Predicated region
      $region13: #{actor_adapter_features_forward.1} parent=11 // pred_check
        %p190 = pneg %p60
      $region14: #{actor_adapter_features_forward.1} parent=11 // pred_check_branch
        %192 = sbr.rel (%p190) target = $region16
      $region15: #{actor_adapter_features_forward.1} parent=11 // pred_region
        _
      $region16: #{actor_adapter_features_forward.1} parent=11 // pred_fallthru
        _
      // Predicated region
      $region17: #{actor_adapter_features_forward.1} parent=11 // pred_check
        %p193 = pneg %p81
      $region18: #{actor_adapter_features_forward.1} parent=11 // pred_check_branch
        %195 = sbr.rel (%p193) target = $region20
      $region19: #{actor_adapter_features_forward.1} parent=11 // pred_region
        _
      $region20: #{actor_adapter_features_forward.1} parent=11 // pred_fallthru
        _
      // Predicated region
      $region21: #{actor_adapter_features_forward.1} parent=11 // pred_check
        %p196 = pneg %p102
      $region22: #{actor_adapter_features_forward.1} parent=11 // pred_check_branch
        %198 = sbr.rel (%p196) target = $region24
      $region23: #{actor_adapter_features_forward.1} parent=11 // pred_region
        _
      $region24: #{actor_adapter_features_forward.1} parent=11 // pred_fallthru
        _
      // Predicated region
      $region25: #{actor_adapter_features_forward.1} parent=11 // pred_check
        %p199 = pneg %p123
      $region26: #{actor_adapter_features_forward.1} parent=11 // pred_check_branch
        %201 = sbr.rel (%p199) target = $region28
      $region27: #{actor_adapter_features_forward.1} parent=11 // pred_region
        _
      $region28: #{actor_adapter_features_forward.1} parent=11 // pred_fallthru
        _
    $region12: #{actor_adapter_features_forward.1} parent=5 // pred_fallthru
      _
    %p202 = scmp.lt.s32.totalorder %s13, 2
    // Predicated region
    $region29: #{actor_adapter_features_forward.1} parent=5 // pred_check
      %p203 = pneg %p202
    $region30: #{actor_adapter_features_forward.1} parent=5 // pred_check_branch
      %205 = sbr.rel (%p203) target = $region32
    $region31: #{actor_adapter_features_forward.1} parent=5 // pred_region
      // Predicated region
      $region33: #{actor_adapter_features_forward.1} parent=31 // pred_check
        %p206 = pneg %p33
      $region34: #{actor_adapter_features_forward.1} parent=31 // pred_check_branch
        %208 = sbr.rel (%p206) target = $region36
      $region35: #{actor_adapter_features_forward.1} parent=31 // pred_region
        %s209 = smul.u32 32, %s13
        %p210 = scmp.lt.s32.totalorder %s209, 63
        %s211 = scalar_select %p210, %s209, 63
        %s212 = smul.addr %s211, 8
        %s213 = scalar_lea.vmem %s0, %s212
        %s214 = smul.u32 32, %s13
      $region36: #{actor_adapter_features_forward.1} parent=31 // pred_fallthru
        _
    $region32: #{actor_adapter_features_forward.1} parent=5 // pred_fallthru
      _
    %p215 = scmp.le.s32.totalorder 1, %s13
    %p216 = scmp.lt.s32.totalorder %s13, 3
    %p217 = pnand %p215, %p216
    %p218 = pneg %p217
    // Predicated region
    $region37: #{actor_adapter_features_forward.1} parent=5 // pred_check
      _
    $region38: #{actor_adapter_features_forward.1} parent=5 // pred_check_branch
      %220 = sbr.rel (%p217) target = $region40
    $region39: #{actor_adapter_features_forward.1} parent=5 // pred_region
      %s221 = ssub.s32 %s13, 1
      %s222 = smul.u32 32, %s18
      %p223 = scmp.lt.s32.totalorder %s222, 63
      %s224 = scalar_select %p223, %s222, 63
      %s225 = smul.addr %s224, 8
      %s226 = scalar_lea.vmem %s0, %s225
      %p227 = pneg %p39
      %p228 = pneg %p36
      %p229 = pneg %p60
      %p230 = pneg %p57
      %p231 = pneg %p81
      %p232 = pneg %p78
      %p233 = pneg %p102
      %p234 = pneg %p99
      %p235 = pneg %p123
      %p236 = pneg %p120
      %p237 = pneg %p149
      %p238 = pneg %p146
      %s239 = smul.u32 32, %s18
      %p240 = scmp.lt.s32.totalorder %s239, 63
      %s241 = scalar_select %p240, %s239, 63
      %s242 = smul.addr %s241, 8
      %s243 = scalar_lea.vmem %s5, %s242
      %p244 = pneg %p175
      %p245 = pneg %p172
      %s246 = smul.u32 32, %s18
      %p247 = scmp.lt.s32.totalorder %s246, 63
      %s248 = scalar_select %p247, %s246, 63
      %s249 = smul.addr %s248, 8
      %s250 = scalar_lea.vmem %s6, %s249
      %s251 = smul.u32 32, %s18
      %p252 = scmp.lt.s32.totalorder %s251, 63
      %s253 = scalar_select %p252, %s251, 63
      %s254 = smul.addr %s253, 8
      %s255 = scalar_lea.vmem %s0, %s254
      %s256 = smul.u32 32, %s18
      %s257 = smul.u32 32, %s18
      %p258 = scmp.lt.s32.totalorder %s257, 63
      %s259 = scalar_select %p258, %s257, 63
      %s260 = smul.addr %s259, 8
      %s261 = scalar_lea.vmem %s5, %s260
      %s262 = smul.u32 32, %s18
      %s263 = smul.u32 32, %s18
      %p264 = scmp.lt.s32.totalorder %s263, 63
      %s265 = scalar_select %p264, %s263, 63
      %s266 = smul.addr %s265, 8
      %s267 = scalar_lea.vmem %s6, %s266
      %s268 = smul.u32 32, %s18
      %v270 = vld [vmem:[%s255] sm:$0xff]
      %v271 = vld [vmem:[%s255 + $0x8] sm:$0xff]
      %v272 = vld [vmem:[%s255 + $0x10] sm:$0xff]
      %v273 = vld [vmem:[%s255 + $0x18] sm:$0xff]
      %v274 = vld [vmem:[%s255 + $0x20] sm:$0xff]
      %v275 = vld [vmem:[%s255 + $0x28] sm:$0xff]
      %v276 = vld [vmem:[%s255 + $0x30] sm:$0xff]
      %v277 = vld [vmem:[%s255 + $0x38] sm:$0xff]
      %v278 = vld [vmem:[%s255 + $0x40] sm:$0xff]
      %v279 = vld [vmem:[%s255 + $0x48] sm:$0xff]
      %v280 = vld [vmem:[%s255 + $0x50] sm:$0xff]
      %v281 = vld [vmem:[%s255 + $0x58] sm:$0xff]
      %v282 = vld [vmem:[%s255 + $0x60] sm:$0xff]
      %v283 = vld [vmem:[%s255 + $0x68] sm:$0xff]
      %v284 = vld [vmem:[%s255 + $0x70] sm:$0xff]
      %v285 = vld [vmem:[%s255 + $0x78] sm:$0xff]
      %v286 = vld [vmem:[%s255 + $0x80] sm:$0xff]
      %v287 = vld [vmem:[%s255 + $0x88] sm:$0xff]
      %v288 = vld [vmem:[%s255 + $0x90] sm:$0xff]
      %v289 = vld [vmem:[%s255 + $0x98] sm:$0xff]
      %v290 = vld [vmem:[%s255 + $0xa0] sm:$0xff]
      %v291 = vld [vmem:[%s255 + $0xa8] sm:$0xff]
      %v292 = vld [vmem:[%s255 + $0xb0] sm:$0xff]
      %v293 = vld [vmem:[%s255 + $0xb8] sm:$0xff]
      %v294 = vld [vmem:[%s255 + $0xc0] sm:$0xff]
      %v295 = vld [vmem:[%s255 + $0xc8] sm:$0xff]
      %v296 = vld [vmem:[%s255 + $0xd0] sm:$0xff]
      %v297 = vld [vmem:[%s255 + $0xd8] sm:$0xff]
      %v298 = vld [vmem:[%s255 + $0xe0] sm:$0xff]
      %v299 = vld [vmem:[%s255 + $0xe8] sm:$0xff]
      %v300 = vld [vmem:[%s255 + $0xf0] sm:$0xff]
      %v301 = vld [vmem:[%s255 + $0xf8] sm:$0xff]
      %v302 = vpack.c.bf16 %v271, %v270
      %v303 = vpack.c.bf16 %v273, %v272
      %v304 = vpack.c.bf16 %v275, %v274
      %v305 = vpack.c.bf16 %v277, %v276
      %v306 = vpack.c.bf16 %v279, %v278
      %v307 = vpack.c.bf16 %v281, %v280
      %v308 = vpack.c.bf16 %v283, %v282
      %v309 = vpack.c.bf16 %v285, %v284
      %v310 = vpack.c.bf16 %v287, %v286
      %v311 = vpack.c.bf16 %v289, %v288
      %v312 = vpack.c.bf16 %v291, %v290
      %v313 = vpack.c.bf16 %v293, %v292
      %v314 = vpack.c.bf16 %v295, %v294
      %v315 = vpack.c.bf16 %v297, %v296
      %v316 = vpack.c.bf16 %v299, %v298
      %v317 = vpack.c.bf16 %v301, %v300
      %v318 = vld [vmem:[%s2] sm:$0x1]
      %v319 = vld [vmem:[%s1] sm:$0xf]
      %v320 = vld [vmem:[%s1 + $0x4] sm:$0xf]
      %v321 = vld [vmem:[%s1 + $0x8] sm:$0x3]
      %v323 = vlaneseq
      %v324 = vshrl.u32 %v323, 7
      %v325 = vsub.s32 0, %v324
      %v326 = vrot.slane %v318, %v325
      %v331 = vunpack.c.l.b16 %v319
      %v332 = vunpack.c.l.b16 %v320
      %v333 = vunpack.c.l.b16 %v321
      %v334 = vpack.c.b16 %v332, %v331
      %v335 = vpack.c.b16 %v333, %v333
      %vm337 = vcmask 162816
      %v339 = vsel %vm337, %v302, 0
      %v342 = vsel %vm337, %v303, 0
      %v345 = vsel %vm337, %v304, 0
      %v348 = vsel %vm337, %v305, 0
      %v351 = vsel %vm337, %v306, 0
      %v354 = vsel %vm337, %v307, 0
      %v357 = vsel %vm337, %v308, 0
      %v360 = vsel %vm337, %v309, 0
      %v363 = vsel %vm337, %v310, 0
      %v366 = vsel %vm337, %v311, 0
      %v369 = vsel %vm337, %v312, 0
      %v372 = vsel %vm337, %v313, 0
      %v375 = vsel %vm337, %v314, 0
      %v378 = vsel %vm337, %v315, 0
      %v381 = vsel %vm337, %v316, 0
      %v384 = vsel %vm337, %v317, 0
      %vm386 = vcmask 1041408
      %v388 = vsel %vm386, %v335, 0
      %390 = vmatprep.subr.bf16.mxu0 0
      %391 = vmatpush1.bf16.msra.mxu0 %v334
      %392 = vmatprep.subr.bf16.mxu0 0
      %393 = vmatpush1.bf16.msra.mxu0 %v388
      %394 = vmatprep.subr.bf16.mxu0 0
      %395 = vmatpush1.bf16.msra.mxu0 0
      %396 = vmatprep.subr.bf16.mxu0 0
      %397 = vmatpush1.bf16.msra.mxu0 0
      %398 = vmatprep.subr.bf16.mxu0 0
      %399 = vmatpush1.bf16.msra.mxu0 0
      %400 = vmatprep.subr.bf16.mxu0 0
      %401 = vmatpush1.bf16.msra.mxu0 0
      %402 = vmatprep.subr.bf16.mxu0 0
      %403 = vmatpush1.bf16.msra.mxu0 0
      %404 = vmatprep.subr.bf16.mxu0 0
      %405 = vmatpush1.bf16.msra.mxu0 0
      %406 = vmatprep.subr.bf16.mxu0 0
      %407 = vmatpush1.bf16.msra.mxu0 0
      %408 = vmatprep.subr.bf16.mxu0 0
      %409 = vmatpush1.bf16.msra.mxu0 0
      %410 = vmatprep.subr.bf16.mxu0 0
      %411 = vmatpush1.bf16.msra.mxu0 0
      %412 = vmatprep.subr.bf16.mxu0 0
      %413 = vmatpush1.bf16.msra.mxu0 0
      %414 = vmatprep.subr.bf16.mxu0 0
      %415 = vmatpush1.bf16.msra.mxu0 0
      %416 = vmatprep.subr.bf16.mxu0 0
      %417 = vmatpush1.bf16.msra.mxu0 0
      %418 = vmatprep.subr.bf16.mxu0 0
      %419 = vmatpush1.bf16.msra.mxu0 0
      %420 = vmatprep.subr.bf16.mxu0 0
      %421 = vmatpush1.bf16.msra.mxu0 0
      %422 = vmatprep.mubr.bf16.mxu0 0
      %423 = vmatmul.mubr.bf16.gmra.mrb[0].mxu0 %v339
      %v424 = vpop.f32.mrb[0].mxu0
      %v425 = vadd.f32 %v326, %v424
      %v426 = vpop.f32.mrb[0].mxu0
      %v427 = vpop.f32.mrb[0].mxu0
      %v428 = vadd.f32 %v326, %v427
      %v429 = vpop.f32.mrb[0].mxu0
      %430 = vmatprep.mubr.bf16.mxu0 0
      %431 = vmatmul.mubr.bf16.gmra.mrb[0].mxu0 %v342
      %v432 = vpop.f32.mrb[0].mxu0
      %v433 = vadd.f32 %v326, %v432
      %v434 = vpop.f32.mrb[0].mxu0
      %v435 = vpop.f32.mrb[0].mxu0
      %v436 = vadd.f32 %v326, %v435
      %v437 = vpop.f32.mrb[0].mxu0
      %438 = vmatprep.mubr.bf16.mxu0 0
      %439 = vmatmul.mubr.bf16.gmra.mrb[0].mxu0 %v345
      %v440 = vpop.f32.mrb[0].mxu0
      %v441 = vadd.f32 %v326, %v440
      %v442 = vpop.f32.mrb[0].mxu0
      %v443 = vpop.f32.mrb[0].mxu0
      %v444 = vadd.f32 %v326, %v443
      %v445 = vpop.f32.mrb[0].mxu0
      %446 = vmatprep.mubr.bf16.mxu0 0
      %447 = vmatmul.mubr.bf16.gmra.mrb[0].mxu0 %v348
      %v448 = vpop.f32.mrb[0].mxu0
      %v449 = vadd.f32 %v326, %v448
      %v450 = vpop.f32.mrb[0].mxu0
      %v451 = vpop.f32.mrb[0].mxu0
      %v452 = vadd.f32 %v326, %v451
      %v453 = vpop.f32.mrb[0].mxu0
      %454 = vmatprep.mubr.bf16.mxu0 0
      %455 = vmatmul.mubr.bf16.gmra.mrb[0].mxu0 %v351
      %v456 = vpop.f32.mrb[0].mxu0
      %v457 = vadd.f32 %v326, %v456
      %v458 = vpop.f32.mrb[0].mxu0
      %v459 = vpop.f32.mrb[0].mxu0
      %v460 = vadd.f32 %v326, %v459
      %v461 = vpop.f32.mrb[0].mxu0
      %462 = vmatprep.mubr.bf16.mxu0 0
      %463 = vmatmul.mubr.bf16.gmra.mrb[0].mxu0 %v354
      %v464 = vpop.f32.mrb[0].mxu0
      %v465 = vadd.f32 %v326, %v464
      %v466 = vpop.f32.mrb[0].mxu0
      %v467 = vpop.f32.mrb[0].mxu0
      %v468 = vadd.f32 %v326, %v467
      %v469 = vpop.f32.mrb[0].mxu0
      %470 = vmatprep.mubr.bf16.mxu0 0
      %471 = vmatmul.mubr.bf16.gmra.mrb[0].mxu0 %v357
      %v472 = vpop.f32.mrb[0].mxu0
      %v473 = vadd.f32 %v326, %v472
      %v474 = vpop.f32.mrb[0].mxu0
      %v475 = vpop.f32.mrb[0].mxu0
      %v476 = vadd.f32 %v326, %v475
      %v477 = vpop.f32.mrb[0].mxu0
      %478 = vmatprep.mubr.bf16.mxu0 0
      %479 = vmatmul.mubr.bf16.gmra.mrb[0].mxu0 %v360
      %v480 = vpop.f32.mrb[0].mxu0
      %v481 = vadd.f32 %v326, %v480
      %v482 = vpop.f32.mrb[0].mxu0
      %v483 = vpop.f32.mrb[0].mxu0
      %v484 = vadd.f32 %v326, %v483
      %v485 = vpop.f32.mrb[0].mxu0
      %486 = vmatprep.mubr.bf16.mxu0 0
      %487 = vmatmul.mubr.bf16.gmra.mrb[0].mxu0 %v363
      %v488 = vpop.f32.mrb[0].mxu0
      %v489 = vadd.f32 %v326, %v488
      %v490 = vpop.f32.mrb[0].mxu0
      %v491 = vpop.f32.mrb[0].mxu0
      %v492 = vadd.f32 %v326, %v491
      %v493 = vpop.f32.mrb[0].mxu0
      %494 = vmatprep.mubr.bf16.mxu0 0
      %495 = vmatmul.mubr.bf16.gmra.mrb[0].mxu0 %v366
      %v496 = vpop.f32.mrb[0].mxu0
      %v497 = vadd.f32 %v326, %v496
      %v498 = vpop.f32.mrb[0].mxu0
      %v499 = vpop.f32.mrb[0].mxu0
      %v500 = vadd.f32 %v326, %v499
      %v501 = vpop.f32.mrb[0].mxu0
      %502 = vmatprep.mubr.bf16.mxu0 0
      %503 = vmatmul.mubr.bf16.gmra.mrb[0].mxu0 %v369
      %v504 = vpop.f32.mrb[0].mxu0
      %v505 = vadd.f32 %v326, %v504
      %v506 = vpop.f32.mrb[0].mxu0
      %v507 = vpop.f32.mrb[0].mxu0
      %v508 = vadd.f32 %v326, %v507
      %v509 = vpop.f32.mrb[0].mxu0
      %510 = vmatprep.mubr.bf16.mxu0 0
      %511 = vmatmul.mubr.bf16.gmra.mrb[0].mxu0 %v372
      %v512 = vpop.f32.mrb[0].mxu0
      %v513 = vadd.f32 %v326, %v512
      %v514 = vpop.f32.mrb[0].mxu0
      %v515 = vpop.f32.mrb[0].mxu0
      %v516 = vadd.f32 %v326, %v515
      %v517 = vpop.f32.mrb[0].mxu0
      %518 = vmatprep.mubr.bf16.mxu0 0
      %519 = vmatmul.mubr.bf16.gmra.mrb[0].mxu0 %v375
      %v520 = vpop.f32.mrb[0].mxu0
      %v521 = vadd.f32 %v326, %v520
      %v522 = vpop.f32.mrb[0].mxu0
      %v523 = vpop.f32.mrb[0].mxu0
      %v524 = vadd.f32 %v326, %v523
      %v525 = vpop.f32.mrb[0].mxu0
      %526 = vmatprep.mubr.bf16.mxu0 0
      %527 = vmatmul.mubr.bf16.gmra.mrb[0].mxu0 %v378
      %v528 = vpop.f32.mrb[0].mxu0
      %v529 = vadd.f32 %v326, %v528
      %v530 = vpop.f32.mrb[0].mxu0
      %v531 = vpop.f32.mrb[0].mxu0
      %v532 = vadd.f32 %v326, %v531
      %v533 = vpop.f32.mrb[0].mxu0
      %534 = vmatprep.mubr.bf16.mxu0 0
      %535 = vmatmul.mubr.bf16.gmra.mrb[0].mxu0 %v381
      %v536 = vpop.f32.mrb[0].mxu0
      %v537 = vadd.f32 %v326, %v536
      %v538 = vpop.f32.mrb[0].mxu0
      %v539 = vpop.f32.mrb[0].mxu0
      %v540 = vadd.f32 %v326, %v539
      %v541 = vpop.f32.mrb[0].mxu0
      %542 = vmatprep.mubr.bf16.mxu0 0
      %543 = vmatmul.mubr.bf16.gmra.mrb[0].mxu0 %v384
      %v544 = vpop.f32.mrb[0].mxu0
      %v545 = vadd.f32 %v326, %v544
      %v546 = vpop.f32.mrb[0].mxu0
      %v547 = vpop.f32.mrb[0].mxu0
      %v548 = vadd.f32 %v326, %v547
      %v549 = vpop.f32.mrb[0].mxu0
      %550 = vdwg.mxu0
      %v551 = vmax.f32 %v425, 0.0
      %v552 = vmax.f32 %v428, 0.0
      %v553 = vmax.f32 %v433, 0.0
      %v554 = vmax.f32 %v436, 0.0
      %v555 = vmax.f32 %v441, 0.0
      %v556 = vmax.f32 %v444, 0.0
      %v557 = vmax.f32 %v449, 0.0
      %v558 = vmax.f32 %v452, 0.0
      %v559 = vmax.f32 %v457, 0.0
      %v560 = vmax.f32 %v460, 0.0
      %v561 = vmax.f32 %v465, 0.0
      %v562 = vmax.f32 %v468, 0.0
      %v563 = vmax.f32 %v473, 0.0
      %v564 = vmax.f32 %v476, 0.0
      %v565 = vmax.f32 %v481, 0.0
      %v566 = vmax.f32 %v484, 0.0
      %v567 = vmax.f32 %v489, 0.0
      %v568 = vmax.f32 %v492, 0.0
      %v569 = vmax.f32 %v497, 0.0
      %v570 = vmax.f32 %v500, 0.0
      %v571 = vmax.f32 %v505, 0.0
      %v572 = vmax.f32 %v508, 0.0
      %v573 = vmax.f32 %v513, 0.0
      %v574 = vmax.f32 %v516, 0.0
      %v575 = vmax.f32 %v521, 0.0
      %v576 = vmax.f32 %v524, 0.0
      %v577 = vmax.f32 %v529, 0.0
      %v578 = vmax.f32 %v532, 0.0
      %v579 = vmax.f32 %v537, 0.0
      %v580 = vmax.f32 %v540, 0.0
      %v581 = vmax.f32 %v545, 0.0
      %v582 = vmax.f32 %v548, 0.0
      %v583 = vpack.c.bf16 %v552, %v551
      %v584 = vpack.c.bf16 %v554, %v553
      %v585 = vpack.c.bf16 %v556, %v555
      %v586 = vpack.c.bf16 %v558, %v557
      %v587 = vpack.c.bf16 %v560, %v559
      %v588 = vpack.c.bf16 %v562, %v561
      %v589 = vpack.c.bf16 %v564, %v563
      %v590 = vpack.c.bf16 %v566, %v565
      %v591 = vpack.c.bf16 %v568, %v567
      %v592 = vpack.c.bf16 %v570, %v569
      %v593 = vpack.c.bf16 %v572, %v571
      %v594 = vpack.c.bf16 %v574, %v573
      %v595 = vpack.c.bf16 %v576, %v575
      %v596 = vpack.c.bf16 %v578, %v577
      %v597 = vpack.c.bf16 %v580, %v579
      %v598 = vpack.c.bf16 %v582, %v581
      %v599 = vld [vmem:[%s3] sm:$0xff]
      %v600 = vld [vmem:[%s3 + $0x8] sm:$0xff]
      %v601 = vld [vmem:[%s3 + $0x10] sm:$0xff]
      %v602 = vld [vmem:[%s3 + $0x18] sm:$0xff]
      %v607 = vunpack.c.l.b16 %v599
      %v608 = vunpack.c.h.b16 %v599
      %v609 = vunpack.c.l.b16 %v600
      %v610 = vunpack.c.h.b16 %v600
      %v611 = vunpack.c.l.b16 %v601
      %v612 = vunpack.c.h.b16 %v601
      %v613 = vunpack.c.l.b16 %v602
      %v614 = vunpack.c.h.b16 %v602
      %v615 = vpack.c.b16 %v609, %v607
      %v616 = vpack.c.b16 %v610, %v608
      %v617 = vpack.c.b16 %v613, %v611
      %v618 = vpack.c.b16 %v614, %v612
      %vm623 = vcmask 261120
      %v625 = vsel %vm623, %v583, 0
      %v628 = vsel %vm623, %v584, 0
      %v631 = vsel %vm623, %v585, 0
      %v634 = vsel %vm623, %v586, 0
      %v637 = vsel %vm623, %v587, 0
      %v640 = vsel %vm623, %v588, 0
      %v643 = vsel %vm623, %v589, 0
      %v646 = vsel %vm623, %v590, 0
      %v649 = vsel %vm623, %v591, 0
      %v652 = vsel %vm623, %v592, 0
      %v655 = vsel %vm623, %v593, 0
      %v658 = vsel %vm623, %v594, 0
      %v661 = vsel %vm623, %v595, 0
      %v664 = vsel %vm623, %v596, 0
      %v667 = vsel %vm623, %v597, 0
      %v670 = vsel %vm623, %v598, 0
      %672 = vmatprep.subr.bf16.mxu0 %v616
      %673 = vmatpush1.bf16.msra.mxu0 %v615
      %674 = vmatprep.subr.bf16.mxu0 %v618
      %675 = vmatpush1.bf16.msra.mxu0 %v617
      %676 = vmatprep.subr.bf16.mxu0 0
      %677 = vmatpush1.bf16.msra.mxu0 0
      %678 = vmatprep.subr.bf16.mxu0 0
      %679 = vmatpush1.bf16.msra.mxu0 0
      %680 = vmatprep.subr.bf16.mxu0 0
      %681 = vmatpush1.bf16.msra.mxu0 0
      %682 = vmatprep.subr.bf16.mxu0 0
      %683 = vmatpush1.bf16.msra.mxu0 0
      %684 = vmatprep.subr.bf16.mxu0 0
      %685 = vmatpush1.bf16.msra.mxu0 0
      %686 = vmatprep.subr.bf16.mxu0 0
      %687 = vmatpush1.bf16.msra.mxu0 0
      %688 = vmatprep.subr.bf16.mxu0 0
      %689 = vmatpush1.bf16.msra.mxu0 0
      %690 = vmatprep.subr.bf16.mxu0 0
      %691 = vmatpush1.bf16.msra.mxu0 0
      %692 = vmatprep.subr.bf16.mxu0 0
      %693 = vmatpush1.bf16.msra.mxu0 0
      %694 = vmatprep.subr.bf16.mxu0 0
      %695 = vmatpush1.bf16.msra.mxu0 0
      %696 = vmatprep.subr.bf16.mxu0 0
      %697 = vmatpush1.bf16.msra.mxu0 0
      %698 = vmatprep.subr.bf16.mxu0 0
      %699 = vmatpush1.bf16.msra.mxu0 0
      %700 = vmatprep.subr.bf16.mxu0 0
      %701 = vmatpush1.bf16.msra.mxu0 0
      %702 = vmatprep.subr.bf16.mxu0 0
      %703 = vmatpush1.bf16.msra.mxu0 0
      %704 = vmatprep.mubr.bf16.mxu0 0
      %705 = vmatmul.mubr.bf16.gmra.mrb[0].mxu0 %v625
      %v706 = vpop.f32.mrb[0].mxu0
      %v707 = vadd.f32 0.0, %v706
      %v708 = vpop.f32.mrb[0].mxu0
      %v709 = vadd.f32 0.0, %v708
      %v710 = vpop.f32.mrb[0].mxu0
      %v711 = vadd.f32 0.0, %v710
      %v712 = vpop.f32.mrb[0].mxu0
      %v713 = vadd.f32 0.0, %v712
      %714 = vmatprep.mubr.bf16.mxu0 0
      %715 = vmatmul.mubr.bf16.gmra.mrb[0].mxu0 %v628
      %v716 = vpop.f32.mrb[0].mxu0
      %v717 = vadd.f32 0.0, %v716
      %v718 = vpop.f32.mrb[0].mxu0
      %v719 = vadd.f32 0.0, %v718
      %v720 = vpop.f32.mrb[0].mxu0
      %v721 = vadd.f32 0.0, %v720
      %v722 = vpop.f32.mrb[0].mxu0
      %v723 = vadd.f32 0.0, %v722
      %724 = vmatprep.mubr.bf16.mxu0 0
      %725 = vmatmul.mubr.bf16.gmra.mrb[0].mxu0 %v631
      %v726 = vpop.f32.mrb[0].mxu0
      %v727 = vadd.f32 0.0, %v726
      %v728 = vpop.f32.mrb[0].mxu0
      %v729 = vadd.f32 0.0, %v728
      %v730 = vpop.f32.mrb[0].mxu0
      %v731 = vadd.f32 0.0, %v730
      %v732 = vpop.f32.mrb[0].mxu0
      %v733 = vadd.f32 0.0, %v732
      %734 = vmatprep.mubr.bf16.mxu0 0
      %735 = vmatmul.mubr.bf16.gmra.mrb[0].mxu0 %v634
      %v736 = vpop.f32.mrb[0].mxu0
      %v737 = vadd.f32 0.0, %v736
      %v738 = vpop.f32.mrb[0].mxu0
      %v739 = vadd.f32 0.0, %v738
      %v740 = vpop.f32.mrb[0].mxu0
      %v741 = vadd.f32 0.0, %v740
      %v742 = vpop.f32.mrb[0].mxu0
      %v743 = vadd.f32 0.0, %v742
      %744 = vmatprep.mubr.bf16.mxu0 0
      %745 = vmatmul.mubr.bf16.gmra.mrb[0].mxu0 %v637
      %v746 = vpop.f32.mrb[0].mxu0
      %v747 = vadd.f32 0.0, %v746
      %v748 = vpop.f32.mrb[0].mxu0
      %v749 = vadd.f32 0.0, %v748
      %v750 = vpop.f32.mrb[0].mxu0
      %v751 = vadd.f32 0.0, %v750
      %v752 = vpop.f32.mrb[0].mxu0
      %v753 = vadd.f32 0.0, %v752
      %754 = vmatprep.mubr.bf16.mxu0 0
      %755 = vmatmul.mubr.bf16.gmra.mrb[0].mxu0 %v640
      %v756 = vpop.f32.mrb[0].mxu0
      %v757 = vadd.f32 0.0, %v756
      %v758 = vpop.f32.mrb[0].mxu0
      %v759 = vadd.f32 0.0, %v758
      %v760 = vpop.f32.mrb[0].mxu0
      %v761 = vadd.f32 0.0, %v760
      %v762 = vpop.f32.mrb[0].mxu0
      %v763 = vadd.f32 0.0, %v762
      %764 = vmatprep.mubr.bf16.mxu0 0
      %765 = vmatmul.mubr.bf16.gmra.mrb[0].mxu0 %v643
      %v766 = vpop.f32.mrb[0].mxu0
      %v767 = vadd.f32 0.0, %v766
      %v768 = vpop.f32.mrb[0].mxu0
      %v769 = vadd.f32 0.0, %v768
      %v770 = vpop.f32.mrb[0].mxu0
      %v771 = vadd.f32 0.0, %v770
      %v772 = vpop.f32.mrb[0].mxu0
      %v773 = vadd.f32 0.0, %v772
      %774 = vmatprep.mubr.bf16.mxu0 0
      %775 = vmatmul.mubr.bf16.gmra.mrb[0].mxu0 %v646
      %v776 = vpop.f32.mrb[0].mxu0
      %v777 = vadd.f32 0.0, %v776
      %v778 = vpop.f32.mrb[0].mxu0
      %v779 = vadd.f32 0.0, %v778
      %v780 = vpop.f32.mrb[0].mxu0
      %v781 = vadd.f32 0.0, %v780
      %v782 = vpop.f32.mrb[0].mxu0
      %v783 = vadd.f32 0.0, %v782
      %784 = vmatprep.mubr.bf16.mxu0 0
      %785 = vmatmul.mubr.bf16.gmra.mrb[0].mxu0 %v649
      %v786 = vpop.f32.mrb[0].mxu0
      %v787 = vadd.f32 0.0, %v786
      %v788 = vpop.f32.mrb[0].mxu0
      %v789 = vadd.f32 0.0, %v788
      %v790 = vpop.f32.mrb[0].mxu0
      %v791 = vadd.f32 0.0, %v790
      %v792 = vpop.f32.mrb[0].mxu0
      %v793 = vadd.f32 0.0, %v792
      %794 = vmatprep.mubr.bf16.mxu0 0
      %795 = vmatmul.mubr.bf16.gmra.mrb[0].mxu0 %v652
      %v796 = vpop.f32.mrb[0].mxu0
      %v797 = vadd.f32 0.0, %v796
      %v798 = vpop.f32.mrb[0].mxu0
      %v799 = vadd.f32 0.0, %v798
      %v800 = vpop.f32.mrb[0].mxu0
      %v801 = vadd.f32 0.0, %v800
      %v802 = vpop.f32.mrb[0].mxu0
      %v803 = vadd.f32 0.0, %v802
      %804 = vmatprep.mubr.bf16.mxu0 0
      %805 = vmatmul.mubr.bf16.gmra.mrb[0].mxu0 %v655
      %v806 = vpop.f32.mrb[0].mxu0
      %v807 = vadd.f32 0.0, %v806
      %v808 = vpop.f32.mrb[0].mxu0
      %v809 = vadd.f32 0.0, %v808
      %v810 = vpop.f32.mrb[0].mxu0
      %v811 = vadd.f32 0.0, %v810
      %v812 = vpop.f32.mrb[0].mxu0
      %v813 = vadd.f32 0.0, %v812
      %814 = vmatprep.mubr.bf16.mxu0 0
      %815 = vmatmul.mubr.bf16.gmra.mrb[0].mxu0 %v658
      %v816 = vpop.f32.mrb[0].mxu0
      %v817 = vadd.f32 0.0, %v816
      %v818 = vpop.f32.mrb[0].mxu0
      %v819 = vadd.f32 0.0, %v818
      %v820 = vpop.f32.mrb[0].mxu0
      %v821 = vadd.f32 0.0, %v820
      %v822 = vpop.f32.mrb[0].mxu0
      %v823 = vadd.f32 0.0, %v822
      %824 = vmatprep.mubr.bf16.mxu0 0
      %825 = vmatmul.mubr.bf16.gmra.mrb[0].mxu0 %v661
      %v826 = vpop.f32.mrb[0].mxu0
      %v827 = vadd.f32 0.0, %v826
      %v828 = vpop.f32.mrb[0].mxu0
      %v829 = vadd.f32 0.0, %v828
      %v830 = vpop.f32.mrb[0].mxu0
      %v831 = vadd.f32 0.0, %v830
      %v832 = vpop.f32.mrb[0].mxu0
      %v833 = vadd.f32 0.0, %v832
      %834 = vmatprep.mubr.bf16.mxu0 0
      %835 = vmatmul.mubr.bf16.gmra.mrb[0].mxu0 %v664
      %v836 = vpop.f32.mrb[0].mxu0
      %v837 = vadd.f32 0.0, %v836
      %v838 = vpop.f32.mrb[0].mxu0
      %v839 = vadd.f32 0.0, %v838
      %v840 = vpop.f32.mrb[0].mxu0
      %v841 = vadd.f32 0.0, %v840
      %v842 = vpop.f32.mrb[0].mxu0
      %v843 = vadd.f32 0.0, %v842
      %844 = vmatprep.mubr.bf16.mxu0 0
      %845 = vmatmul.mubr.bf16.gmra.mrb[0].mxu0 %v667
      %v846 = vpop.f32.mrb[0].mxu0
      %v847 = vadd.f32 0.0, %v846
      %v848 = vpop.f32.mrb[0].mxu0
      %v849 = vadd.f32 0.0, %v848
      %v850 = vpop.f32.mrb[0].mxu0
      %v851 = vadd.f32 0.0, %v850
      %v852 = vpop.f32.mrb[0].mxu0
      %v853 = vadd.f32 0.0, %v852
      %854 = vmatprep.mubr.bf16.mxu0 0
      %855 = vmatmul.mubr.bf16.gmra.mrb[0].mxu0 %v670
      %v856 = vpop.f32.mrb[0].mxu0
      %v857 = vadd.f32 0.0, %v856
      %v858 = vpop.f32.mrb[0].mxu0
      %v859 = vadd.f32 0.0, %v858
      %v860 = vpop.f32.mrb[0].mxu0
      %v861 = vadd.f32 0.0, %v860
      %v862 = vpop.f32.mrb[0].mxu0
      %v863 = vadd.f32 0.0, %v862
      %864 = vdwg.mxu0
      %897 = vrot.lane.b32.xlu0 %v425, 96
      %v898 = vpop.permute.xlu0 %897
      %899 = vrot.lane.b32.xlu0 %v428, 96
      %v900 = vpop.permute.xlu0 %899
      %901 = vrot.lane.b32.xlu0 %v433, 96
      %v902 = vpop.permute.xlu0 %901
      %903 = vrot.lane.b32.xlu0 %v436, 96
      %v904 = vpop.permute.xlu0 %903
      %905 = vrot.lane.b32.xlu0 %v441, 96
      %v906 = vpop.permute.xlu0 %905
      %907 = vrot.lane.b32.xlu0 %v444, 96
      %v908 = vpop.permute.xlu0 %907
      %909 = vrot.lane.b32.xlu0 %v449, 96
      %v910 = vpop.permute.xlu0 %909
      %911 = vrot.lane.b32.xlu0 %v452, 96
      %v912 = vpop.permute.xlu0 %911
      %913 = vrot.lane.b32.xlu0 %v457, 96
      %v914 = vpop.permute.xlu0 %913
      %915 = vrot.lane.b32.xlu0 %v460, 96
      %v916 = vpop.permute.xlu0 %915
      %917 = vrot.lane.b32.xlu0 %v465, 96
      %v918 = vpop.permute.xlu0 %917
      %919 = vrot.lane.b32.xlu0 %v468, 96
      %v920 = vpop.permute.xlu0 %919
      %921 = vrot.lane.b32.xlu0 %v473, 96
      %v922 = vpop.permute.xlu0 %921
      %923 = vrot.lane.b32.xlu0 %v476, 96
      %v924 = vpop.permute.xlu0 %923
      %925 = vrot.lane.b32.xlu0 %v481, 96
      %v926 = vpop.permute.xlu0 %925
      %927 = vrot.lane.b32.xlu0 %v484, 96
      %v928 = vpop.permute.xlu0 %927
      %929 = vrot.lane.b32.xlu0 %v489, 96
      %v930 = vpop.permute.xlu0 %929
      %931 = vrot.lane.b32.xlu0 %v492, 96
      %v932 = vpop.permute.xlu0 %931
      %933 = vrot.lane.b32.xlu0 %v497, 96
      %v934 = vpop.permute.xlu0 %933
      %935 = vrot.lane.b32.xlu0 %v500, 96
      %v936 = vpop.permute.xlu0 %935
      %937 = vrot.lane.b32.xlu0 %v505, 96
      %v938 = vpop.permute.xlu0 %937
      %939 = vrot.lane.b32.xlu0 %v508, 96
      %v940 = vpop.permute.xlu0 %939
      %941 = vrot.lane.b32.xlu0 %v513, 96
      %v942 = vpop.permute.xlu0 %941
      %943 = vrot.lane.b32.xlu0 %v516, 96
      %v944 = vpop.permute.xlu0 %943
      %945 = vrot.lane.b32.xlu0 %v521, 96
      %v946 = vpop.permute.xlu0 %945
      %947 = vrot.lane.b32.xlu0 %v524, 96
      %v948 = vpop.permute.xlu0 %947
      %949 = vrot.lane.b32.xlu0 %v529, 96
      %v950 = vpop.permute.xlu0 %949
      %951 = vrot.lane.b32.xlu0 %v532, 96
      %v952 = vpop.permute.xlu0 %951
      %953 = vrot.lane.b32.xlu0 %v537, 96
      %v954 = vpop.permute.xlu0 %953
      %955 = vrot.lane.b32.xlu0 %v540, 96
      %v956 = vpop.permute.xlu0 %955
      %957 = vrot.lane.b32.xlu0 %v545, 96
      %v958 = vpop.permute.xlu0 %957
      %959 = vrot.lane.b32.xlu0 %v548, 96
      %v960 = vpop.permute.xlu0 %959
      %v993 = vadd.f32 %v709, %v898
      %v994 = vadd.f32 %v713, %v900
      %v995 = vadd.f32 %v719, %v902
      %v996 = vadd.f32 %v723, %v904
      %v997 = vadd.f32 %v729, %v906
      %v998 = vadd.f32 %v733, %v908
      %v999 = vadd.f32 %v739, %v910
      %v1000 = vadd.f32 %v743, %v912
      %v1001 = vadd.f32 %v749, %v914
      %v1002 = vadd.f32 %v753, %v916
      %v1003 = vadd.f32 %v759, %v918
      %v1004 = vadd.f32 %v763, %v920
      %v1005 = vadd.f32 %v769, %v922
      %v1006 = vadd.f32 %v773, %v924
      %v1007 = vadd.f32 %v779, %v926
      %v1008 = vadd.f32 %v783, %v928
      %v1009 = vadd.f32 %v789, %v930
      %v1010 = vadd.f32 %v793, %v932
      %v1011 = vadd.f32 %v799, %v934
      %v1012 = vadd.f32 %v803, %v936
      %v1013 = vadd.f32 %v809, %v938
      %v1014 = vadd.f32 %v813, %v940
      %v1015 = vadd.f32 %v819, %v942
      %v1016 = vadd.f32 %v823, %v944
      %v1017 = vadd.f32 %v829, %v946
      %v1018 = vadd.f32 %v833, %v948
      %v1019 = vadd.f32 %v839, %v950
      %v1020 = vadd.f32 %v843, %v952
      %v1021 = vadd.f32 %v849, %v954
      %v1022 = vadd.f32 %v853, %v956
      %v1023 = vadd.f32 %v859, %v958
      %v1024 = vadd.f32 %v863, %v960
      %1026 = vset.pattern.permute.xlu0 16
      %1027 = vperm.xlu0 %1026, %v270
      %v1028 = vpop.permute.xlu0 %1027
      %1031 = vset.pattern.permute.xlu0 16
      %1032 = vperm.xlu0 %1031, %v271
      %v1033 = vpop.permute.xlu0 %1032
      %1036 = vset.pattern.permute.xlu0 16
      %1037 = vperm.xlu0 %1036, %v272
      %v1038 = vpop.permute.xlu0 %1037
      %1041 = vset.pattern.permute.xlu0 16
      %1042 = vperm.xlu0 %1041, %v273
      %v1043 = vpop.permute.xlu0 %1042
      %1046 = vset.pattern.permute.xlu0 16
      %1047 = vperm.xlu0 %1046, %v274
      %v1048 = vpop.permute.xlu0 %1047
      %1051 = vset.pattern.permute.xlu0 16
      %1052 = vperm.xlu0 %1051, %v275
      %v1053 = vpop.permute.xlu0 %1052
      %1056 = vset.pattern.permute.xlu0 16
      %1057 = vperm.xlu0 %1056, %v276
      %v1058 = vpop.permute.xlu0 %1057
      %1061 = vset.pattern.permute.xlu0 16
      %1062 = vperm.xlu0 %1061, %v277
      %v1063 = vpop.permute.xlu0 %1062
      %1066 = vset.pattern.permute.xlu0 16
      %1067 = vperm.xlu0 %1066, %v278
      %v1068 = vpop.permute.xlu0 %1067
      %1071 = vset.pattern.permute.xlu0 16
      %1072 = vperm.xlu0 %1071, %v279
      %v1073 = vpop.permute.xlu0 %1072
      %1076 = vset.pattern.permute.xlu0 16
      %1077 = vperm.xlu0 %1076, %v280
      %v1078 = vpop.permute.xlu0 %1077
      %1081 = vset.pattern.permute.xlu0 16
      %1082 = vperm.xlu0 %1081, %v281
      %v1083 = vpop.permute.xlu0 %1082
      %1086 = vset.pattern.permute.xlu0 16
      %1087 = vperm.xlu0 %1086, %v282
      %v1088 = vpop.permute.xlu0 %1087
      %1091 = vset.pattern.permute.xlu0 16
      %1092 = vperm.xlu0 %1091, %v283
      %v1093 = vpop.permute.xlu0 %1092
      %1096 = vset.pattern.permute.xlu0 16
      %1097 = vperm.xlu0 %1096, %v284
      %v1098 = vpop.permute.xlu0 %1097
      %1101 = vset.pattern.permute.xlu0 16
      %1102 = vperm.xlu0 %1101, %v285
      %v1103 = vpop.permute.xlu0 %1102
      %1106 = vset.pattern.permute.xlu0 16
      %1107 = vperm.xlu0 %1106, %v286
      %v1108 = vpop.permute.xlu0 %1107
      %1111 = vset.pattern.permute.xlu0 16
      %1112 = vperm.xlu0 %1111, %v287
      %v1113 = vpop.permute.xlu0 %1112
      %1116 = vset.pattern.permute.xlu0 16
      %1117 = vperm.xlu0 %1116, %v288
      %v1118 = vpop.permute.xlu0 %1117
      %1121 = vset.pattern.permute.xlu0 16
      %1122 = vperm.xlu0 %1121, %v289
      %v1123 = vpop.permute.xlu0 %1122
      %1126 = vset.pattern.permute.xlu0 16
      %1127 = vperm.xlu0 %1126, %v290
      %v1128 = vpop.permute.xlu0 %1127
      %1131 = vset.pattern.permute.xlu0 16
      %1132 = vperm.xlu0 %1131, %v291
      %v1133 = vpop.permute.xlu0 %1132
      %1136 = vset.pattern.permute.xlu0 16
      %1137 = vperm.xlu0 %1136, %v292
      %v1138 = vpop.permute.xlu0 %1137
      %1141 = vset.pattern.permute.xlu0 16
      %1142 = vperm.xlu0 %1141, %v293
      %v1143 = vpop.permute.xlu0 %1142
      %1146 = vset.pattern.permute.xlu0 16
      %1147 = vperm.xlu0 %1146, %v294
      %v1148 = vpop.permute.xlu0 %1147
      %1151 = vset.pattern.permute.xlu0 16
      %1152 = vperm.xlu0 %1151, %v295
      %v1153 = vpop.permute.xlu0 %1152
      %1156 = vset.pattern.permute.xlu0 16
      %1157 = vperm.xlu0 %1156, %v296
      %v1158 = vpop.permute.xlu0 %1157
      %1161 = vset.pattern.permute.xlu0 16
      %1162 = vperm.xlu0 %1161, %v297
      %v1163 = vpop.permute.xlu0 %1162
      %1166 = vset.pattern.permute.xlu0 16
      %1167 = vperm.xlu0 %1166, %v298
      %v1168 = vpop.permute.xlu0 %1167
      %1171 = vset.pattern.permute.xlu0 16
      %1172 = vperm.xlu0 %1171, %v299
      %v1173 = vpop.permute.xlu0 %1172
      %1176 = vset.pattern.permute.xlu0 16
      %1177 = vperm.xlu0 %1176, %v300
      %v1178 = vpop.permute.xlu0 %1177
      %1181 = vset.pattern.permute.xlu0 16
      %1182 = vperm.xlu0 %1181, %v301
      %v1183 = vpop.permute.xlu0 %1182
      %v1185 = vmul.f32 %v1028, %v707
      %v1186 = vmul.f32 %v1033, %v711
      %v1187 = vmul.f32 %v1038, %v717
      %v1188 = vmul.f32 %v1043, %v721
      %v1189 = vmul.f32 %v1048, %v727
      %v1190 = vmul.f32 %v1053, %v731
      %v1191 = vmul.f32 %v1058, %v737
      %v1192 = vmul.f32 %v1063, %v741
      %v1193 = vmul.f32 %v1068, %v747
      %v1194 = vmul.f32 %v1073, %v751
      %v1195 = vmul.f32 %v1078, %v757
      %v1196 = vmul.f32 %v1083, %v761
      %v1197 = vmul.f32 %v1088, %v767
      %v1198 = vmul.f32 %v1093, %v771
      %v1199 = vmul.f32 %v1098, %v777
      %v1200 = vmul.f32 %v1103, %v781
      %v1201 = vmul.f32 %v1108, %v787
      %v1202 = vmul.f32 %v1113, %v791
      %v1203 = vmul.f32 %v1118, %v797
      %v1204 = vmul.f32 %v1123, %v801
      %v1205 = vmul.f32 %v1128, %v807
      %v1206 = vmul.f32 %v1133, %v811
      %v1207 = vmul.f32 %v1138, %v817
      %v1208 = vmul.f32 %v1143, %v821
      %v1209 = vmul.f32 %v1148, %v827
      %v1210 = vmul.f32 %v1153, %v831
      %v1211 = vmul.f32 %v1158, %v837
      %v1212 = vmul.f32 %v1163, %v841
      %v1213 = vmul.f32 %v1168, %v847
      %v1214 = vmul.f32 %v1173, %v851
      %v1215 = vmul.f32 %v1178, %v857
      %v1216 = vmul.f32 %v1183, %v861
      %v1217 = vadd.f32 %v993, %v1185
      %v1218 = vadd.f32 %v994, %v1186
      %v1219 = vadd.f32 %v995, %v1187
      %v1220 = vadd.f32 %v996, %v1188
      %v1221 = vadd.f32 %v997, %v1189
      %v1222 = vadd.f32 %v998, %v1190
      %v1223 = vadd.f32 %v999, %v1191
      %v1224 = vadd.f32 %v1000, %v1192
      %v1225 = vadd.f32 %v1001, %v1193
      %v1226 = vadd.f32 %v1002, %v1194
      %v1227 = vadd.f32 %v1003, %v1195
      %v1228 = vadd.f32 %v1004, %v1196
      %v1229 = vadd.f32 %v1005, %v1197
      %v1230 = vadd.f32 %v1006, %v1198
      %v1231 = vadd.f32 %v1007, %v1199
      %v1232 = vadd.f32 %v1008, %v1200
      %v1233 = vadd.f32 %v1009, %v1201
      %v1234 = vadd.f32 %v1010, %v1202
      %v1235 = vadd.f32 %v1011, %v1203
      %v1236 = vadd.f32 %v1012, %v1204
      %v1237 = vadd.f32 %v1013, %v1205
      %v1238 = vadd.f32 %v1014, %v1206
      %v1239 = vadd.f32 %v1015, %v1207
      %v1240 = vadd.f32 %v1016, %v1208
      %v1241 = vadd.f32 %v1017, %v1209
      %v1242 = vadd.f32 %v1018, %v1210
      %v1243 = vadd.f32 %v1019, %v1211
      %v1244 = vadd.f32 %v1020, %v1212
      %v1245 = vadd.f32 %v1021, %v1213
      %v1246 = vadd.f32 %v1022, %v1214
      %v1247 = vadd.f32 %v1023, %v1215
      %v1248 = vadd.f32 %v1024, %v1216
      %1249 = vset.pattern.permute.xlu0 17
      %1250 = vperm.xlu0 %1249, %v270
      %v1251 = vpop.permute.xlu0 %1250
      %1253 = vset.pattern.permute.xlu0 17
      %1254 = vperm.xlu0 %1253, %v271
      %v1255 = vpop.permute.xlu0 %1254
      %1257 = vset.pattern.permute.xlu0 17
      %1258 = vperm.xlu0 %1257, %v272
      %v1259 = vpop.permute.xlu0 %1258
      %1261 = vset.pattern.permute.xlu0 17
      %1262 = vperm.xlu0 %1261, %v273
      %v1263 = vpop.permute.xlu0 %1262
      %1265 = vset.pattern.permute.xlu0 17
      %1266 = vperm.xlu0 %1265, %v274
      %v1267 = vpop.permute.xlu0 %1266
      %1269 = vset.pattern.permute.xlu0 17
      %1270 = vperm.xlu0 %1269, %v275
      %v1271 = vpop.permute.xlu0 %1270
      %1273 = vset.pattern.permute.xlu0 17
      %1274 = vperm.xlu0 %1273, %v276
      %v1275 = vpop.permute.xlu0 %1274
      %1277 = vset.pattern.permute.xlu0 17
      %1278 = vperm.xlu0 %1277, %v277
      %v1279 = vpop.permute.xlu0 %1278
      %1281 = vset.pattern.permute.xlu0 17
      %1282 = vperm.xlu0 %1281, %v278
      %v1283 = vpop.permute.xlu0 %1282
      %1285 = vset.pattern.permute.xlu0 17
      %1286 = vperm.xlu0 %1285, %v279
      %v1287 = vpop.permute.xlu0 %1286
      %1289 = vset.pattern.permute.xlu0 17
      %1290 = vperm.xlu0 %1289, %v280
      %v1291 = vpop.permute.xlu0 %1290
      %1293 = vset.pattern.permute.xlu0 17
      %1294 = vperm.xlu0 %1293, %v281
      %v1295 = vpop.permute.xlu0 %1294
      %1297 = vset.pattern.permute.xlu0 17
      %1298 = vperm.xlu0 %1297, %v282
      %v1299 = vpop.permute.xlu0 %1298
      %1301 = vset.pattern.permute.xlu0 17
      %1302 = vperm.xlu0 %1301, %v283
      %v1303 = vpop.permute.xlu0 %1302
      %1305 = vset.pattern.permute.xlu0 17
      %1306 = vperm.xlu0 %1305, %v284
      %v1307 = vpop.permute.xlu0 %1306
      %1309 = vset.pattern.permute.xlu0 17
      %1310 = vperm.xlu0 %1309, %v285
      %v1311 = vpop.permute.xlu0 %1310
      %1313 = vset.pattern.permute.xlu0 17
      %1314 = vperm.xlu0 %1313, %v286
      %v1315 = vpop.permute.xlu0 %1314
      %1317 = vset.pattern.permute.xlu0 17
      %1318 = vperm.xlu0 %1317, %v287
      %v1319 = vpop.permute.xlu0 %1318
      %1321 = vset.pattern.permute.xlu0 17
      %1322 = vperm.xlu0 %1321, %v288
      %v1323 = vpop.permute.xlu0 %1322
      %1325 = vset.pattern.permute.xlu0 17
      %1326 = vperm.xlu0 %1325, %v289
      %v1327 = vpop.permute.xlu0 %1326
      %1329 = vset.pattern.permute.xlu0 17
      %1330 = vperm.xlu0 %1329, %v290
      %v1331 = vpop.permute.xlu0 %1330
      %1333 = vset.pattern.permute.xlu0 17
      %1334 = vperm.xlu0 %1333, %v291
      %v1335 = vpop.permute.xlu0 %1334
      %1337 = vset.pattern.permute.xlu0 17
      %1338 = vperm.xlu0 %1337, %v292
      %v1339 = vpop.permute.xlu0 %1338
      %1341 = vset.pattern.permute.xlu0 17
      %1342 = vperm.xlu0 %1341, %v293
      %v1343 = vpop.permute.xlu0 %1342
      %1345 = vset.pattern.permute.xlu0 17
      %1346 = vperm.xlu0 %1345, %v294
      %v1347 = vpop.permute.xlu0 %1346
      %1349 = vset.pattern.permute.xlu0 17
      %1350 = vperm.xlu0 %1349, %v295
      %v1351 = vpop.permute.xlu0 %1350
      %1353 = vset.pattern.permute.xlu0 17
      %1354 = vperm.xlu0 %1353, %v296
      %v1355 = vpop.permute.xlu0 %1354
      %1357 = vset.pattern.permute.xlu0 17
      %1358 = vperm.xlu0 %1357, %v297
      %v1359 = vpop.permute.xlu0 %1358
      %1361 = vset.pattern.permute.xlu0 17
      %1362 = vperm.xlu0 %1361, %v298
      %v1363 = vpop.permute.xlu0 %1362
      %1365 = vset.pattern.permute.xlu0 17
      %1366 = vperm.xlu0 %1365, %v299
      %v1367 = vpop.permute.xlu0 %1366
      %1369 = vset.pattern.permute.xlu0 17
      %1370 = vperm.xlu0 %1369, %v300
      %v1371 = vpop.permute.xlu0 %1370
      %1373 = vset.pattern.permute.xlu0 17
      %1374 = vperm.xlu0 %1373, %v301
      %v1375 = vpop.permute.xlu0 %1374
      %v1377 = vmul.f32 %v1251, %v707
      %v1378 = vmul.f32 %v1255, %v711
      %v1379 = vmul.f32 %v1259, %v717
      %v1380 = vmul.f32 %v1263, %v721
      %v1381 = vmul.f32 %v1267, %v727
      %v1382 = vmul.f32 %v1271, %v731
      %v1383 = vmul.f32 %v1275, %v737
      %v1384 = vmul.f32 %v1279, %v741
      %v1385 = vmul.f32 %v1283, %v747
      %v1386 = vmul.f32 %v1287, %v751
      %v1387 = vmul.f32 %v1291, %v757
      %v1388 = vmul.f32 %v1295, %v761
      %v1389 = vmul.f32 %v1299, %v767
      %v1390 = vmul.f32 %v1303, %v771
      %v1391 = vmul.f32 %v1307, %v777
      %v1392 = vmul.f32 %v1311, %v781
      %v1393 = vmul.f32 %v1315, %v787
      %v1394 = vmul.f32 %v1319, %v791
      %v1395 = vmul.f32 %v1323, %v797
      %v1396 = vmul.f32 %v1327, %v801
      %v1397 = vmul.f32 %v1331, %v807
      %v1398 = vmul.f32 %v1335, %v811
      %v1399 = vmul.f32 %v1339, %v817
      %v1400 = vmul.f32 %v1343, %v821
      %v1401 = vmul.f32 %v1347, %v827
      %v1402 = vmul.f32 %v1351, %v831
      %v1403 = vmul.f32 %v1355, %v837
      %v1404 = vmul.f32 %v1359, %v841
      %v1405 = vmul.f32 %v1363, %v847
      %v1406 = vmul.f32 %v1367, %v851
      %v1407 = vmul.f32 %v1371, %v857
      %v1408 = vmul.f32 %v1375, %v861
      %1441 = vrot.lane.b32.xlu0 %v1377, 96
      %v1442 = vpop.permute.xlu0 %1441
      %1443 = vrot.lane.b32.xlu0 %v1378, 96
      %v1444 = vpop.permute.xlu0 %1443
      %1445 = vrot.lane.b32.xlu0 %v1379, 96
      %v1446 = vpop.permute.xlu0 %1445
      %1447 = vrot.lane.b32.xlu0 %v1380, 96
      %v1448 = vpop.permute.xlu0 %1447
      %1449 = vrot.lane.b32.xlu0 %v1381, 96
      %v1450 = vpop.permute.xlu0 %1449
      %1451 = vrot.lane.b32.xlu0 %v1382, 96
      %v1452 = vpop.permute.xlu0 %1451
      %1453 = vrot.lane.b32.xlu0 %v1383, 96
      %v1454 = vpop.permute.xlu0 %1453
      %1455 = vrot.lane.b32.xlu0 %v1384, 96
      %v1456 = vpop.permute.xlu0 %1455
      %1457 = vrot.lane.b32.xlu0 %v1385, 96
      %v1458 = vpop.permute.xlu0 %1457
      %1459 = vrot.lane.b32.xlu0 %v1386, 96
      %v1460 = vpop.permute.xlu0 %1459
      %1461 = vrot.lane.b32.xlu0 %v1387, 96
      %v1462 = vpop.permute.xlu0 %1461
      %1463 = vrot.lane.b32.xlu0 %v1388, 96
      %v1464 = vpop.permute.xlu0 %1463
      %1465 = vrot.lane.b32.xlu0 %v1389, 96
      %v1466 = vpop.permute.xlu0 %1465
      %1467 = vrot.lane.b32.xlu0 %v1390, 96
      %v1468 = vpop.permute.xlu0 %1467
      %1469 = vrot.lane.b32.xlu0 %v1391, 96
      %v1470 = vpop.permute.xlu0 %1469
      %1471 = vrot.lane.b32.xlu0 %v1392, 96
      %v1472 = vpop.permute.xlu0 %1471
      %1473 = vrot.lane.b32.xlu0 %v1393, 96
      %v1474 = vpop.permute.xlu0 %1473
      %1475 = vrot.lane.b32.xlu0 %v1394, 96
      %v1476 = vpop.permute.xlu0 %1475
      %1477 = vrot.lane.b32.xlu0 %v1395, 96
      %v1478 = vpop.permute.xlu0 %1477
      %1479 = vrot.lane.b32.xlu0 %v1396, 96
      %v1480 = vpop.permute.xlu0 %1479
      %1481 = vrot.lane.b32.xlu0 %v1397, 96
      %v1482 = vpop.permute.xlu0 %1481
      %1483 = vrot.lane.b32.xlu0 %v1398, 96
      %v1484 = vpop.permute.xlu0 %1483
      %1485 = vrot.lane.b32.xlu0 %v1399, 96
      %v1486 = vpop.permute.xlu0 %1485
      %1487 = vrot.lane.b32.xlu0 %v1400, 96
      %v1488 = vpop.permute.xlu0 %1487
      %1489 = vrot.lane.b32.xlu0 %v1401, 96
      %v1490 = vpop.permute.xlu0 %1489
      %1491 = vrot.lane.b32.xlu0 %v1402, 96
      %v1492 = vpop.permute.xlu0 %1491
      %1493 = vrot.lane.b32.xlu0 %v1403, 96
      %v1494 = vpop.permute.xlu0 %1493
      %1495 = vrot.lane.b32.xlu0 %v1404, 96
      %v1496 = vpop.permute.xlu0 %1495
      %1497 = vrot.lane.b32.xlu0 %v1405, 96
      %v1498 = vpop.permute.xlu0 %1497
      %1499 = vrot.lane.b32.xlu0 %v1406, 96
      %v1500 = vpop.permute.xlu0 %1499
      %1501 = vrot.lane.b32.xlu0 %v1407, 96
      %v1502 = vpop.permute.xlu0 %1501
      %1503 = vrot.lane.b32.xlu0 %v1408, 96
      %v1504 = vpop.permute.xlu0 %1503
      %v1537 = vadd.f32 %v1217, %v1442
      %v1538 = vadd.f32 %v1218, %v1444
      %v1539 = vadd.f32 %v1219, %v1446
      %v1540 = vadd.f32 %v1220, %v1448
      %v1541 = vadd.f32 %v1221, %v1450
      %v1542 = vadd.f32 %v1222, %v1452
      %v1543 = vadd.f32 %v1223, %v1454
      %v1544 = vadd.f32 %v1224, %v1456
      %v1545 = vadd.f32 %v1225, %v1458
      %v1546 = vadd.f32 %v1226, %v1460
      %v1547 = vadd.f32 %v1227, %v1462
      %v1548 = vadd.f32 %v1228, %v1464
      %v1549 = vadd.f32 %v1229, %v1466
      %v1550 = vadd.f32 %v1230, %v1468
      %v1551 = vadd.f32 %v1231, %v1470
      %v1552 = vadd.f32 %v1232, %v1472
      %v1553 = vadd.f32 %v1233, %v1474
      %v1554 = vadd.f32 %v1234, %v1476
      %v1555 = vadd.f32 %v1235, %v1478
      %v1556 = vadd.f32 %v1236, %v1480
      %v1557 = vadd.f32 %v1237, %v1482
      %v1558 = vadd.f32 %v1238, %v1484
      %v1559 = vadd.f32 %v1239, %v1486
      %v1560 = vadd.f32 %v1240, %v1488
      %v1561 = vadd.f32 %v1241, %v1490
      %v1562 = vadd.f32 %v1242, %v1492
      %v1563 = vadd.f32 %v1243, %v1494
      %v1564 = vadd.f32 %v1244, %v1496
      %v1565 = vadd.f32 %v1245, %v1498
      %v1566 = vadd.f32 %v1246, %v1500
      %v1567 = vadd.f32 %v1247, %v1502
      %v1568 = vadd.f32 %v1248, %v1504
      %1569 = vset.pattern.permute.xlu0 18
      %1570 = vperm.xlu0 %1569, %v270
      %v1571 = vpop.permute.xlu0 %1570
      %1573 = vset.pattern.permute.xlu0 18
      %1574 = vperm.xlu0 %1573, %v271
      %v1575 = vpop.permute.xlu0 %1574
      %1577 = vset.pattern.permute.xlu0 18
      %1578 = vperm.xlu0 %1577, %v272
      %v1579 = vpop.permute.xlu0 %1578
      %1581 = vset.pattern.permute.xlu0 18
      %1582 = vperm.xlu0 %1581, %v273
      %v1583 = vpop.permute.xlu0 %1582
      %1585 = vset.pattern.permute.xlu0 18
      %1586 = vperm.xlu0 %1585, %v274
      %v1587 = vpop.permute.xlu0 %1586
      %1589 = vset.pattern.permute.xlu0 18
      %1590 = vperm.xlu0 %1589, %v275
      %v1591 = vpop.permute.xlu0 %1590
      %1593 = vset.pattern.permute.xlu0 18
      %1594 = vperm.xlu0 %1593, %v276
      %v1595 = vpop.permute.xlu0 %1594
      %1597 = vset.pattern.permute.xlu0 18
      %1598 = vperm.xlu0 %1597, %v277
      %v1599 = vpop.permute.xlu0 %1598
      %1601 = vset.pattern.permute.xlu0 18
      %1602 = vperm.xlu0 %1601, %v278
      %v1603 = vpop.permute.xlu0 %1602
      %1605 = vset.pattern.permute.xlu0 18
      %1606 = vperm.xlu0 %1605, %v279
      %v1607 = vpop.permute.xlu0 %1606
      %1609 = vset.pattern.permute.xlu0 18
      %1610 = vperm.xlu0 %1609, %v280
      %v1611 = vpop.permute.xlu0 %1610
      %1613 = vset.pattern.permute.xlu0 18
      %1614 = vperm.xlu0 %1613, %v281
      %v1615 = vpop.permute.xlu0 %1614
      %1617 = vset.pattern.permute.xlu0 18
      %1618 = vperm.xlu0 %1617, %v282
      %v1619 = vpop.permute.xlu0 %1618
      %1621 = vset.pattern.permute.xlu0 18
      %1622 = vperm.xlu0 %1621, %v283
      %v1623 = vpop.permute.xlu0 %1622
      %1625 = vset.pattern.permute.xlu0 18
      %1626 = vperm.xlu0 %1625, %v284
      %v1627 = vpop.permute.xlu0 %1626
      %1629 = vset.pattern.permute.xlu0 18
      %1630 = vperm.xlu0 %1629, %v285
      %v1631 = vpop.permute.xlu0 %1630
      %1633 = vset.pattern.permute.xlu0 18
      %1634 = vperm.xlu0 %1633, %v286
      %v1635 = vpop.permute.xlu0 %1634
      %1637 = vset.pattern.permute.xlu0 18
      %1638 = vperm.xlu0 %1637, %v287
      %v1639 = vpop.permute.xlu0 %1638
      %1641 = vset.pattern.permute.xlu0 18
      %1642 = vperm.xlu0 %1641, %v288
      %v1643 = vpop.permute.xlu0 %1642
      %1645 = vset.pattern.permute.xlu0 18
      %1646 = vperm.xlu0 %1645, %v289
      %v1647 = vpop.permute.xlu0 %1646
      %1649 = vset.pattern.permute.xlu0 18
      %1650 = vperm.xlu0 %1649, %v290
      %v1651 = vpop.permute.xlu0 %1650
      %1653 = vset.pattern.permute.xlu0 18
      %1654 = vperm.xlu0 %1653, %v291
      %v1655 = vpop.permute.xlu0 %1654
      %1657 = vset.pattern.permute.xlu0 18
      %1658 = vperm.xlu0 %1657, %v292
      %v1659 = vpop.permute.xlu0 %1658
      %1661 = vset.pattern.permute.xlu0 18
      %1662 = vperm.xlu0 %1661, %v293
      %v1663 = vpop.permute.xlu0 %1662
      %1665 = vset.pattern.permute.xlu0 18
      %1666 = vperm.xlu0 %1665, %v294
      %v1667 = vpop.permute.xlu0 %1666
      %1669 = vset.pattern.permute.xlu0 18
      %1670 = vperm.xlu0 %1669, %v295
      %v1671 = vpop.permute.xlu0 %1670
      %1673 = vset.pattern.permute.xlu0 18
      %1674 = vperm.xlu0 %1673, %v296
      %v1675 = vpop.permute.xlu0 %1674
      %1677 = vset.pattern.permute.xlu0 18
      %1678 = vperm.xlu0 %1677, %v297
      %v1679 = vpop.permute.xlu0 %1678
      %1681 = vset.pattern.permute.xlu0 18
      %1682 = vperm.xlu0 %1681, %v298
      %v1683 = vpop.permute.xlu0 %1682
      %1685 = vset.pattern.permute.xlu0 18
      %1686 = vperm.xlu0 %1685, %v299
      %v1687 = vpop.permute.xlu0 %1686
      %1689 = vset.pattern.permute.xlu0 18
      %1690 = vperm.xlu0 %1689, %v300
      %v1691 = vpop.permute.xlu0 %1690
      %1693 = vset.pattern.permute.xlu0 18
      %1694 = vperm.xlu0 %1693, %v301
      %v1695 = vpop.permute.xlu0 %1694
      %v1697 = vmul.f32 %v1571, %v707
      %v1698 = vmul.f32 %v1575, %v711
      %v1699 = vmul.f32 %v1579, %v717
      %v1700 = vmul.f32 %v1583, %v721
      %v1701 = vmul.f32 %v1587, %v727
      %v1702 = vmul.f32 %v1591, %v731
      %v1703 = vmul.f32 %v1595, %v737
      %v1704 = vmul.f32 %v1599, %v741
      %v1705 = vmul.f32 %v1603, %v747
      %v1706 = vmul.f32 %v1607, %v751
      %v1707 = vmul.f32 %v1611, %v757
      %v1708 = vmul.f32 %v1615, %v761
      %v1709 = vmul.f32 %v1619, %v767
      %v1710 = vmul.f32 %v1623, %v771
      %v1711 = vmul.f32 %v1627, %v777
      %v1712 = vmul.f32 %v1631, %v781
      %v1713 = vmul.f32 %v1635, %v787
      %v1714 = vmul.f32 %v1639, %v791
      %v1715 = vmul.f32 %v1643, %v797
      %v1716 = vmul.f32 %v1647, %v801
      %v1717 = vmul.f32 %v1651, %v807
      %v1718 = vmul.f32 %v1655, %v811
      %v1719 = vmul.f32 %v1659, %v817
      %v1720 = vmul.f32 %v1663, %v821
      %v1721 = vmul.f32 %v1667, %v827
      %v1722 = vmul.f32 %v1671, %v831
      %v1723 = vmul.f32 %v1675, %v837
      %v1724 = vmul.f32 %v1679, %v841
      %v1725 = vmul.f32 %v1683, %v847
      %v1726 = vmul.f32 %v1687, %v851
      %v1727 = vmul.f32 %v1691, %v857
      %v1728 = vmul.f32 %v1695, %v861
      %1761 = vrot.lane.b32.xlu0 %v1697, 64
      %v1762 = vpop.permute.xlu0 %1761
      %1763 = vrot.lane.b32.xlu0 %v1698, 64
      %v1764 = vpop.permute.xlu0 %1763
      %1765 = vrot.lane.b32.xlu0 %v1699, 64
      %v1766 = vpop.permute.xlu0 %1765
      %1767 = vrot.lane.b32.xlu0 %v1700, 64
      %v1768 = vpop.permute.xlu0 %1767
      %1769 = vrot.lane.b32.xlu0 %v1701, 64
      %v1770 = vpop.permute.xlu0 %1769
      %1771 = vrot.lane.b32.xlu0 %v1702, 64
      %v1772 = vpop.permute.xlu0 %1771
      %1773 = vrot.lane.b32.xlu0 %v1703, 64
      %v1774 = vpop.permute.xlu0 %1773
      %1775 = vrot.lane.b32.xlu0 %v1704, 64
      %v1776 = vpop.permute.xlu0 %1775
      %1777 = vrot.lane.b32.xlu0 %v1705, 64
      %v1778 = vpop.permute.xlu0 %1777
      %1779 = vrot.lane.b32.xlu0 %v1706, 64
      %v1780 = vpop.permute.xlu0 %1779
      %1781 = vrot.lane.b32.xlu0 %v1707, 64
      %v1782 = vpop.permute.xlu0 %1781
      %1783 = vrot.lane.b32.xlu0 %v1708, 64
      %v1784 = vpop.permute.xlu0 %1783
      %1785 = vrot.lane.b32.xlu0 %v1709, 64
      %v1786 = vpop.permute.xlu0 %1785
      %1787 = vrot.lane.b32.xlu0 %v1710, 64
      %v1788 = vpop.permute.xlu0 %1787
      %1789 = vrot.lane.b32.xlu0 %v1711, 64
      %v1790 = vpop.permute.xlu0 %1789
      %1791 = vrot.lane.b32.xlu0 %v1712, 64
      %v1792 = vpop.permute.xlu0 %1791
      %1793 = vrot.lane.b32.xlu0 %v1713, 64
      %v1794 = vpop.permute.xlu0 %1793
      %1795 = vrot.lane.b32.xlu0 %v1714, 64
      %v1796 = vpop.permute.xlu0 %1795
      %1797 = vrot.lane.b32.xlu0 %v1715, 64
      %v1798 = vpop.permute.xlu0 %1797
      %1799 = vrot.lane.b32.xlu0 %v1716, 64
      %v1800 = vpop.permute.xlu0 %1799
      %1801 = vrot.lane.b32.xlu0 %v1717, 64
      %v1802 = vpop.permute.xlu0 %1801
      %1803 = vrot.lane.b32.xlu0 %v1718, 64
      %v1804 = vpop.permute.xlu0 %1803
      %1805 = vrot.lane.b32.xlu0 %v1719, 64
      %v1806 = vpop.permute.xlu0 %1805
      %1807 = vrot.lane.b32.xlu0 %v1720, 64
      %v1808 = vpop.permute.xlu0 %1807
      %1809 = vrot.lane.b32.xlu0 %v1721, 64
      %v1810 = vpop.permute.xlu0 %1809
      %1811 = vrot.lane.b32.xlu0 %v1722, 64
      %v1812 = vpop.permute.xlu0 %1811
      %1813 = vrot.lane.b32.xlu0 %v1723, 64
      %v1814 = vpop.permute.xlu0 %1813
      %1815 = vrot.lane.b32.xlu0 %v1724, 64
      %v1816 = vpop.permute.xlu0 %1815
      %1817 = vrot.lane.b32.xlu0 %v1725, 64
      %v1818 = vpop.permute.xlu0 %1817
      %1819 = vrot.lane.b32.xlu0 %v1726, 64
      %v1820 = vpop.permute.xlu0 %1819
      %1821 = vrot.lane.b32.xlu0 %v1727, 64
      %v1822 = vpop.permute.xlu0 %1821
      %1823 = vrot.lane.b32.xlu0 %v1728, 64
      %v1824 = vpop.permute.xlu0 %1823
      %v1857 = vadd.f32 %v1537, %v1762
      %v1858 = vadd.f32 %v1538, %v1764
      %v1859 = vadd.f32 %v1539, %v1766
      %v1860 = vadd.f32 %v1540, %v1768
      %v1861 = vadd.f32 %v1541, %v1770
      %v1862 = vadd.f32 %v1542, %v1772
      %v1863 = vadd.f32 %v1543, %v1774
      %v1864 = vadd.f32 %v1544, %v1776
      %v1865 = vadd.f32 %v1545, %v1778
      %v1866 = vadd.f32 %v1546, %v1780
      %v1867 = vadd.f32 %v1547, %v1782
      %v1868 = vadd.f32 %v1548, %v1784
      %v1869 = vadd.f32 %v1549, %v1786
      %v1870 = vadd.f32 %v1550, %v1788
      %v1871 = vadd.f32 %v1551, %v1790
      %v1872 = vadd.f32 %v1552, %v1792
      %v1873 = vadd.f32 %v1553, %v1794
      %v1874 = vadd.f32 %v1554, %v1796
      %v1875 = vadd.f32 %v1555, %v1798
      %v1876 = vadd.f32 %v1556, %v1800
      %v1877 = vadd.f32 %v1557, %v1802
      %v1878 = vadd.f32 %v1558, %v1804
      %v1879 = vadd.f32 %v1559, %v1806
      %v1880 = vadd.f32 %v1560, %v1808
      %v1881 = vadd.f32 %v1561, %v1810
      %v1882 = vadd.f32 %v1562, %v1812
      %v1883 = vadd.f32 %v1563, %v1814
      %v1884 = vadd.f32 %v1564, %v1816
      %v1885 = vadd.f32 %v1565, %v1818
      %v1886 = vadd.f32 %v1566, %v1820
      %v1887 = vadd.f32 %v1567, %v1822
      %v1888 = vadd.f32 %v1568, %v1824
      %1889 = vset.pattern.permute.xlu0 19
      %1890 = vperm.xlu0 %1889, %v270
      %v1891 = vpop.permute.xlu0 %1890
      %1893 = vset.pattern.permute.xlu0 19
      %1894 = vperm.xlu0 %1893, %v271
      %v1895 = vpop.permute.xlu0 %1894
      %1897 = vset.pattern.permute.xlu0 19
      %1898 = vperm.xlu0 %1897, %v272
      %v1899 = vpop.permute.xlu0 %1898
      %1901 = vset.pattern.permute.xlu0 19
      %1902 = vperm.xlu0 %1901, %v273
      %v1903 = vpop.permute.xlu0 %1902
      %1905 = vset.pattern.permute.xlu0 19
      %1906 = vperm.xlu0 %1905, %v274
      %v1907 = vpop.permute.xlu0 %1906
      %1909 = vset.pattern.permute.xlu0 19
      %1910 = vperm.xlu0 %1909, %v275
      %v1911 = vpop.permute.xlu0 %1910
      %1913 = vset.pattern.permute.xlu0 19
      %1914 = vperm.xlu0 %1913, %v276
      %v1915 = vpop.permute.xlu0 %1914
      %1917 = vset.pattern.permute.xlu0 19
      %1918 = vperm.xlu0 %1917, %v277
      %v1919 = vpop.permute.xlu0 %1918
      %1921 = vset.pattern.permute.xlu0 19
      %1922 = vperm.xlu0 %1921, %v278
      %v1923 = vpop.permute.xlu0 %1922
      %1925 = vset.pattern.permute.xlu0 19
      %1926 = vperm.xlu0 %1925, %v279
      %v1927 = vpop.permute.xlu0 %1926
      %1929 = vset.pattern.permute.xlu0 19
      %1930 = vperm.xlu0 %1929, %v280
      %v1931 = vpop.permute.xlu0 %1930
      %1933 = vset.pattern.permute.xlu0 19
      %1934 = vperm.xlu0 %1933, %v281
      %v1935 = vpop.permute.xlu0 %1934
      %1937 = vset.pattern.permute.xlu0 19
      %1938 = vperm.xlu0 %1937, %v282
      %v1939 = vpop.permute.xlu0 %1938
      %1941 = vset.pattern.permute.xlu0 19
      %1942 = vperm.xlu0 %1941, %v283
      %v1943 = vpop.permute.xlu0 %1942
      %1945 = vset.pattern.permute.xlu0 19
      %1946 = vperm.xlu0 %1945, %v284
      %v1947 = vpop.permute.xlu0 %1946
      %1949 = vset.pattern.permute.xlu0 19
      %1950 = vperm.xlu0 %1949, %v285
      %v1951 = vpop.permute.xlu0 %1950
      %1953 = vset.pattern.permute.xlu0 19
      %1954 = vperm.xlu0 %1953, %v286
      %v1955 = vpop.permute.xlu0 %1954
      %1957 = vset.pattern.permute.xlu0 19
      %1958 = vperm.xlu0 %1957, %v287
      %v1959 = vpop.permute.xlu0 %1958
      %1961 = vset.pattern.permute.xlu0 19
      %1962 = vperm.xlu0 %1961, %v288
      %v1963 = vpop.permute.xlu0 %1962
      %1965 = vset.pattern.permute.xlu0 19
      %1966 = vperm.xlu0 %1965, %v289
      %v1967 = vpop.permute.xlu0 %1966
      %1969 = vset.pattern.permute.xlu0 19
      %1970 = vperm.xlu0 %1969, %v290
      %v1971 = vpop.permute.xlu0 %1970
      %1973 = vset.pattern.permute.xlu0 19
      %1974 = vperm.xlu0 %1973, %v291
      %v1975 = vpop.permute.xlu0 %1974
      %1977 = vset.pattern.permute.xlu0 19
      %1978 = vperm.xlu0 %1977, %v292
      %v1979 = vpop.permute.xlu0 %1978
      %1981 = vset.pattern.permute.xlu0 19
      %1982 = vperm.xlu0 %1981, %v293
      %v1983 = vpop.permute.xlu0 %1982
      %1985 = vset.pattern.permute.xlu0 19
      %1986 = vperm.xlu0 %1985, %v294
      %v1987 = vpop.permute.xlu0 %1986
      %1989 = vset.pattern.permute.xlu0 19
      %1990 = vperm.xlu0 %1989, %v295
      %v1991 = vpop.permute.xlu0 %1990
      %1993 = vset.pattern.permute.xlu0 19
      %1994 = vperm.xlu0 %1993, %v296
      %v1995 = vpop.permute.xlu0 %1994
      %1997 = vset.pattern.permute.xlu0 19
      %1998 = vperm.xlu0 %1997, %v297
      %v1999 = vpop.permute.xlu0 %1998
      %2001 = vset.pattern.permute.xlu0 19
      %2002 = vperm.xlu0 %2001, %v298
      %v2003 = vpop.permute.xlu0 %2002
      %2005 = vset.pattern.permute.xlu0 19
      %2006 = vperm.xlu0 %2005, %v299
      %v2007 = vpop.permute.xlu0 %2006
      %2009 = vset.pattern.permute.xlu0 19
      %2010 = vperm.xlu0 %2009, %v300
      %v2011 = vpop.permute.xlu0 %2010
      %2013 = vset.pattern.permute.xlu0 19
      %2014 = vperm.xlu0 %2013, %v301
      %v2015 = vpop.permute.xlu0 %2014
      %v2017 = vmul.f32 %v1891, %v707
      %v2018 = vmul.f32 %v1895, %v711
      %v2019 = vmul.f32 %v1899, %v717
      %v2020 = vmul.f32 %v1903, %v721
      %v2021 = vmul.f32 %v1907, %v727
      %v2022 = vmul.f32 %v1911, %v731
      %v2023 = vmul.f32 %v1915, %v737
      %v2024 = vmul.f32 %v1919, %v741
      %v2025 = vmul.f32 %v1923, %v747
      %v2026 = vmul.f32 %v1927, %v751
      %v2027 = vmul.f32 %v1931, %v757
      %v2028 = vmul.f32 %v1935, %v761
      %v2029 = vmul.f32 %v1939, %v767
      %v2030 = vmul.f32 %v1943, %v771
      %v2031 = vmul.f32 %v1947, %v777
      %v2032 = vmul.f32 %v1951, %v781
      %v2033 = vmul.f32 %v1955, %v787
      %v2034 = vmul.f32 %v1959, %v791
      %v2035 = vmul.f32 %v1963, %v797
      %v2036 = vmul.f32 %v1967, %v801
      %v2037 = vmul.f32 %v1971, %v807
      %v2038 = vmul.f32 %v1975, %v811
      %v2039 = vmul.f32 %v1979, %v817
      %v2040 = vmul.f32 %v1983, %v821
      %v2041 = vmul.f32 %v1987, %v827
      %v2042 = vmul.f32 %v1991, %v831
      %v2043 = vmul.f32 %v1995, %v837
      %v2044 = vmul.f32 %v1999, %v841
      %v2045 = vmul.f32 %v2003, %v847
      %v2046 = vmul.f32 %v2007, %v851
      %v2047 = vmul.f32 %v2011, %v857
      %v2048 = vmul.f32 %v2015, %v861
      %2081 = vrot.lane.b32.xlu0 %v2017, 32
      %v2082 = vpop.permute.xlu0 %2081
      %2083 = vrot.lane.b32.xlu0 %v2018, 32
      %v2084 = vpop.permute.xlu0 %2083
      %2085 = vrot.lane.b32.xlu0 %v2019, 32
      %v2086 = vpop.permute.xlu0 %2085
      %2087 = vrot.lane.b32.xlu0 %v2020, 32
      %v2088 = vpop.permute.xlu0 %2087
      %2089 = vrot.lane.b32.xlu0 %v2021, 32
      %v2090 = vpop.permute.xlu0 %2089
      %2091 = vrot.lane.b32.xlu0 %v2022, 32
      %v2092 = vpop.permute.xlu0 %2091
      %2093 = vrot.lane.b32.xlu0 %v2023, 32
      %v2094 = vpop.permute.xlu0 %2093
      %2095 = vrot.lane.b32.xlu0 %v2024, 32
      %v2096 = vpop.permute.xlu0 %2095
      %2097 = vrot.lane.b32.xlu0 %v2025, 32
      %v2098 = vpop.permute.xlu0 %2097
      %2099 = vrot.lane.b32.xlu0 %v2026, 32
      %v2100 = vpop.permute.xlu0 %2099
      %2101 = vrot.lane.b32.xlu0 %v2027, 32
      %v2102 = vpop.permute.xlu0 %2101
      %2103 = vrot.lane.b32.xlu0 %v2028, 32
      %v2104 = vpop.permute.xlu0 %2103
      %2105 = vrot.lane.b32.xlu0 %v2029, 32
      %v2106 = vpop.permute.xlu0 %2105
      %2107 = vrot.lane.b32.xlu0 %v2030, 32
      %v2108 = vpop.permute.xlu0 %2107
      %2109 = vrot.lane.b32.xlu0 %v2031, 32
      %v2110 = vpop.permute.xlu0 %2109
      %2111 = vrot.lane.b32.xlu0 %v2032, 32
      %v2112 = vpop.permute.xlu0 %2111
      %2113 = vrot.lane.b32.xlu0 %v2033, 32
      %v2114 = vpop.permute.xlu0 %2113
      %2115 = vrot.lane.b32.xlu0 %v2034, 32
      %v2116 = vpop.permute.xlu0 %2115
      %2117 = vrot.lane.b32.xlu0 %v2035, 32
      %v2118 = vpop.permute.xlu0 %2117
      %2119 = vrot.lane.b32.xlu0 %v2036, 32
      %v2120 = vpop.permute.xlu0 %2119
      %2121 = vrot.lane.b32.xlu0 %v2037, 32
      %v2122 = vpop.permute.xlu0 %2121
      %2123 = vrot.lane.b32.xlu0 %v2038, 32
      %v2124 = vpop.permute.xlu0 %2123
      %2125 = vrot.lane.b32.xlu0 %v2039, 32
      %v2126 = vpop.permute.xlu0 %2125
      %2127 = vrot.lane.b32.xlu0 %v2040, 32
      %v2128 = vpop.permute.xlu0 %2127
      %2129 = vrot.lane.b32.xlu0 %v2041, 32
      %v2130 = vpop.permute.xlu0 %2129
      %2131 = vrot.lane.b32.xlu0 %v2042, 32
      %v2132 = vpop.permute.xlu0 %2131
      %2133 = vrot.lane.b32.xlu0 %v2043, 32
      %v2134 = vpop.permute.xlu0 %2133
      %2135 = vrot.lane.b32.xlu0 %v2044, 32
      %v2136 = vpop.permute.xlu0 %2135
      %2137 = vrot.lane.b32.xlu0 %v2045, 32
      %v2138 = vpop.permute.xlu0 %2137
      %2139 = vrot.lane.b32.xlu0 %v2046, 32
      %v2140 = vpop.permute.xlu0 %2139
      %2141 = vrot.lane.b32.xlu0 %v2047, 32
      %v2142 = vpop.permute.xlu0 %2141
      %2143 = vrot.lane.b32.xlu0 %v2048, 32
      %v2144 = vpop.permute.xlu0 %2143
      %v2177 = vadd.f32 %v1857, %v2082
      %v2178 = vadd.f32 %v1858, %v2084
      %v2179 = vadd.f32 %v1859, %v2086
      %v2180 = vadd.f32 %v1860, %v2088
      %v2181 = vadd.f32 %v1861, %v2090
      %v2182 = vadd.f32 %v1862, %v2092
      %v2183 = vadd.f32 %v1863, %v2094
      %v2184 = vadd.f32 %v1864, %v2096
      %v2185 = vadd.f32 %v1865, %v2098
      %v2186 = vadd.f32 %v1866, %v2100
      %v2187 = vadd.f32 %v1867, %v2102
      %v2188 = vadd.f32 %v1868, %v2104
      %v2189 = vadd.f32 %v1869, %v2106
      %v2190 = vadd.f32 %v1870, %v2108
      %v2191 = vadd.f32 %v1871, %v2110
      %v2192 = vadd.f32 %v1872, %v2112
      %v2193 = vadd.f32 %v1873, %v2114
      %v2194 = vadd.f32 %v1874, %v2116
      %v2195 = vadd.f32 %v1875, %v2118
      %v2196 = vadd.f32 %v1876, %v2120
      %v2197 = vadd.f32 %v1877, %v2122
      %v2198 = vadd.f32 %v1878, %v2124
      %v2199 = vadd.f32 %v1879, %v2126
      %v2200 = vadd.f32 %v1880, %v2128
      %v2201 = vadd.f32 %v1881, %v2130
      %v2202 = vadd.f32 %v1882, %v2132
      %v2203 = vadd.f32 %v1883, %v2134
      %v2204 = vadd.f32 %v1884, %v2136
      %v2205 = vadd.f32 %v1885, %v2138
      %v2206 = vadd.f32 %v1886, %v2140
      %v2207 = vadd.f32 %v1887, %v2142
      %v2208 = vadd.f32 %v1888, %v2144
      %v2209 = vpack.c.bf16 %v2178, %v2177
      %v2210 = vpack.c.bf16 %v2180, %v2179
      %v2211 = vpack.c.bf16 %v2182, %v2181
      %v2212 = vpack.c.bf16 %v2184, %v2183
      %v2213 = vpack.c.bf16 %v2186, %v2185
      %v2214 = vpack.c.bf16 %v2188, %v2187
      %v2215 = vpack.c.bf16 %v2190, %v2189
      %v2216 = vpack.c.bf16 %v2192, %v2191
      %v2217 = vpack.c.bf16 %v2194, %v2193
      %v2218 = vpack.c.bf16 %v2196, %v2195
      %v2219 = vpack.c.bf16 %v2198, %v2197
      %v2220 = vpack.c.bf16 %v2200, %v2199
      %v2221 = vpack.c.bf16 %v2202, %v2201
      %v2222 = vpack.c.bf16 %v2204, %v2203
      %v2223 = vpack.c.bf16 %v2206, %v2205
      %v2224 = vpack.c.bf16 %v2208, %v2207
      %v2225 = vld [vmem:[%s4] sm:$0xf]
      %v2226 = vld [vmem:[%s4 + $0x4] sm:$0xf]
      %v2227 = vld [vmem:[%s4 + $0x8] sm:$0xf]
      %v2228 = vld [vmem:[%s4 + $0xc] sm:$0xf]
      %v2233 = vunpack.c.l.b16 %v2225
      %v2234 = vunpack.c.l.b16 %v2226
      %v2235 = vunpack.c.l.b16 %v2227
      %v2236 = vunpack.c.l.b16 %v2228
      %v2237 = vpack.c.b16 %v2234, %v2233
      %v2238 = vpack.c.b16 %v2236, %v2235
      %2241 = vrot.lane.b32.xlu0 %v326, 64
      %v2242 = vpop.permute.xlu0 %2241
      %v2245 = vsel %vm623, %v2209, 0
      %v2248 = vsel %vm623, %v2210, 0
      %v2251 = vsel %vm623, %v2211, 0
      %v2254 = vsel %vm623, %v2212, 0
      %v2257 = vsel %vm623, %v2213, 0
      %v2260 = vsel %vm623, %v2214, 0
      %v2263 = vsel %vm623, %v2215, 0
      %v2266 = vsel %vm623, %v2216, 0
      %v2269 = vsel %vm623, %v2217, 0
      %v2272 = vsel %vm623, %v2218, 0
      %v2275 = vsel %vm623, %v2219, 0
      %v2278 = vsel %vm623, %v2220, 0
      %v2281 = vsel %vm623, %v2221, 0
      %v2284 = vsel %vm623, %v2222, 0
      %v2287 = vsel %vm623, %v2223, 0
      %v2290 = vsel %vm623, %v2224, 0
      %2292 = vmatprep.subr.bf16.mxu0 0
      %2293 = vmatpush1.bf16.msra.mxu0 %v2237
      %2294 = vmatprep.subr.bf16.mxu0 0
      %2295 = vmatpush1.bf16.msra.mxu0 %v2238
      %2296 = vmatprep.subr.bf16.mxu0 0
      %2297 = vmatpush1.bf16.msra.mxu0 0
      %2298 = vmatprep.subr.bf16.mxu0 0
      %2299 = vmatpush1.bf16.msra.mxu0 0
      %2300 = vmatprep.subr.bf16.mxu0 0
      %2301 = vmatpush1.bf16.msra.mxu0 0
      %2302 = vmatprep.subr.bf16.mxu0 0
      %2303 = vmatpush1.bf16.msra.mxu0 0
      %2304 = vmatprep.subr.bf16.mxu0 0
      %2305 = vmatpush1.bf16.msra.mxu0 0
      %2306 = vmatprep.subr.bf16.mxu0 0
      %2307 = vmatpush1.bf16.msra.mxu0 0
      %2308 = vmatprep.subr.bf16.mxu0 0
      %2309 = vmatpush1.bf16.msra.mxu0 0
      %2310 = vmatprep.subr.bf16.mxu0 0
      %2311 = vmatpush1.bf16.msra.mxu0 0
      %2312 = vmatprep.subr.bf16.mxu0 0
      %2313 = vmatpush1.bf16.msra.mxu0 0
      %2314 = vmatprep.subr.bf16.mxu0 0
      %2315 = vmatpush1.bf16.msra.mxu0 0
      %2316 = vmatprep.subr.bf16.mxu0 0
      %2317 = vmatpush1.bf16.msra.mxu0 0
      %2318 = vmatprep.subr.bf16.mxu0 0
      %2319 = vmatpush1.bf16.msra.mxu0 0
      %2320 = vmatprep.subr.bf16.mxu0 0
      %2321 = vmatpush1.bf16.msra.mxu0 0
      %2322 = vmatprep.subr.bf16.mxu0 0
      %2323 = vmatpush1.bf16.msra.mxu0 0
      %2324 = vmatprep.mubr.bf16.mxu0 0
      %2325 = vmatmul.mubr.bf16.gmra.mrb[0].mxu0 %v2245
      %v2326 = vpop.f32.mrb[0].mxu0
      %v2327 = vadd.f32 %v2242, %v2326
      %v2328 = vpop.f32.mrb[0].mxu0
      %v2329 = vpop.f32.mrb[0].mxu0
      %v2330 = vadd.f32 %v2242, %v2329
      %v2331 = vpop.f32.mrb[0].mxu0
      %2332 = vmatprep.mubr.bf16.mxu0 0
      %2333 = vmatmul.mubr.bf16.gmra.mrb[0].mxu0 %v2248
      %v2334 = vpop.f32.mrb[0].mxu0
      %v2335 = vadd.f32 %v2242, %v2334
      %v2336 = vpop.f32.mrb[0].mxu0
      %v2337 = vpop.f32.mrb[0].mxu0
      %v2338 = vadd.f32 %v2242, %v2337
      %v2339 = vpop.f32.mrb[0].mxu0
      %2340 = vmatprep.mubr.bf16.mxu0 0
      %2341 = vmatmul.mubr.bf16.gmra.mrb[0].mxu0 %v2251
      %v2342 = vpop.f32.mrb[0].mxu0
      %v2343 = vadd.f32 %v2242, %v2342
      %v2344 = vpop.f32.mrb[0].mxu0
      %v2345 = vpop.f32.mrb[0].mxu0
      %v2346 = vadd.f32 %v2242, %v2345
      %v2347 = vpop.f32.mrb[0].mxu0
      %2348 = vmatprep.mubr.bf16.mxu0 0
      %2349 = vmatmul.mubr.bf16.gmra.mrb[0].mxu0 %v2254
      %v2350 = vpop.f32.mrb[0].mxu0
      %v2351 = vadd.f32 %v2242, %v2350
      %v2352 = vpop.f32.mrb[0].mxu0
      %v2353 = vpop.f32.mrb[0].mxu0
      %v2354 = vadd.f32 %v2242, %v2353
      %v2355 = vpop.f32.mrb[0].mxu0
      %2356 = vmatprep.mubr.bf16.mxu0 0
      %2357 = vmatmul.mubr.bf16.gmra.mrb[0].mxu0 %v2257
      %v2358 = vpop.f32.mrb[0].mxu0
      %v2359 = vadd.f32 %v2242, %v2358
      %v2360 = vpop.f32.mrb[0].mxu0
      %v2361 = vpop.f32.mrb[0].mxu0
      %v2362 = vadd.f32 %v2242, %v2361
      %v2363 = vpop.f32.mrb[0].mxu0
      %2364 = vmatprep.mubr.bf16.mxu0 0
      %2365 = vmatmul.mubr.bf16.gmra.mrb[0].mxu0 %v2260
      %v2366 = vpop.f32.mrb[0].mxu0
      %v2367 = vadd.f32 %v2242, %v2366
      %v2368 = vpop.f32.mrb[0].mxu0
      %v2369 = vpop.f32.mrb[0].mxu0
      %v2370 = vadd.f32 %v2242, %v2369
      %v2371 = vpop.f32.mrb[0].mxu0
      %2372 = vmatprep.mubr.bf16.mxu0 0
      %2373 = vmatmul.mubr.bf16.gmra.mrb[0].mxu0 %v2263
      %v2374 = vpop.f32.mrb[0].mxu0
      %v2375 = vadd.f32 %v2242, %v2374
      %v2376 = vpop.f32.mrb[0].mxu0
      %v2377 = vpop.f32.mrb[0].mxu0
      %v2378 = vadd.f32 %v2242, %v2377
      %v2379 = vpop.f32.mrb[0].mxu0
      %2380 = vmatprep.mubr.bf16.mxu0 0
      %2381 = vmatmul.mubr.bf16.gmra.mrb[0].mxu0 %v2266
      %v2382 = vpop.f32.mrb[0].mxu0
      %v2383 = vadd.f32 %v2242, %v2382
      %v2384 = vpop.f32.mrb[0].mxu0
      %v2385 = vpop.f32.mrb[0].mxu0
      %v2386 = vadd.f32 %v2242, %v2385
      %v2387 = vpop.f32.mrb[0].mxu0
      %2388 = vmatprep.mubr.bf16.mxu0 0
      %2389 = vmatmul.mubr.bf16.gmra.mrb[0].mxu0 %v2269
      %v2390 = vpop.f32.mrb[0].mxu0
      %v2391 = vadd.f32 %v2242, %v2390
      %v2392 = vpop.f32.mrb[0].mxu0
      %v2393 = vpop.f32.mrb[0].mxu0
      %v2394 = vadd.f32 %v2242, %v2393
      %v2395 = vpop.f32.mrb[0].mxu0
      %2396 = vmatprep.mubr.bf16.mxu0 0
      %2397 = vmatmul.mubr.bf16.gmra.mrb[0].mxu0 %v2272
      %v2398 = vpop.f32.mrb[0].mxu0
      %v2399 = vadd.f32 %v2242, %v2398
      %v2400 = vpop.f32.mrb[0].mxu0
      %v2401 = vpop.f32.mrb[0].mxu0
      %v2402 = vadd.f32 %v2242, %v2401
      %v2403 = vpop.f32.mrb[0].mxu0
      %2404 = vmatprep.mubr.bf16.mxu0 0
      %2405 = vmatmul.mubr.bf16.gmra.mrb[0].mxu0 %v2275
      %v2406 = vpop.f32.mrb[0].mxu0
      %v2407 = vadd.f32 %v2242, %v2406
      %v2408 = vpop.f32.mrb[0].mxu0
      %v2409 = vpop.f32.mrb[0].mxu0
      %v2410 = vadd.f32 %v2242, %v2409
      %v2411 = vpop.f32.mrb[0].mxu0
      %2412 = vmatprep.mubr.bf16.mxu0 0
      %2413 = vmatmul.mubr.bf16.gmra.mrb[0].mxu0 %v2278
      %v2414 = vpop.f32.mrb[0].mxu0
      %v2415 = vadd.f32 %v2242, %v2414
      %v2416 = vpop.f32.mrb[0].mxu0
      %v2417 = vpop.f32.mrb[0].mxu0
      %v2418 = vadd.f32 %v2242, %v2417
      %v2419 = vpop.f32.mrb[0].mxu0
      %2420 = vmatprep.mubr.bf16.mxu0 0
      %2421 = vmatmul.mubr.bf16.gmra.mrb[0].mxu0 %v2281
      %v2422 = vpop.f32.mrb[0].mxu0
      %v2423 = vadd.f32 %v2242, %v2422
      %v2424 = vpop.f32.mrb[0].mxu0
      %v2425 = vpop.f32.mrb[0].mxu0
      %v2426 = vadd.f32 %v2242, %v2425
      %v2427 = vpop.f32.mrb[0].mxu0
      %2428 = vmatprep.mubr.bf16.mxu0 0
      %2429 = vmatmul.mubr.bf16.gmra.mrb[0].mxu0 %v2284
      %v2430 = vpop.f32.mrb[0].mxu0
      %v2431 = vadd.f32 %v2242, %v2430
      %v2432 = vpop.f32.mrb[0].mxu0
      %v2433 = vpop.f32.mrb[0].mxu0
      %v2434 = vadd.f32 %v2242, %v2433
      %v2435 = vpop.f32.mrb[0].mxu0
      %2436 = vmatprep.mubr.bf16.mxu0 0
      %2437 = vmatmul.mubr.bf16.gmra.mrb[0].mxu0 %v2287
      %v2438 = vpop.f32.mrb[0].mxu0
      %v2439 = vadd.f32 %v2242, %v2438
      %v2440 = vpop.f32.mrb[0].mxu0
      %v2441 = vpop.f32.mrb[0].mxu0
      %v2442 = vadd.f32 %v2242, %v2441
      %v2443 = vpop.f32.mrb[0].mxu0
      %2444 = vmatprep.mubr.bf16.mxu0 0
      %2445 = vmatmul.mubr.bf16.gmra.mrb[0].mxu0 %v2290
      %v2446 = vpop.f32.mrb[0].mxu0
      %v2447 = vadd.f32 %v2242, %v2446
      %v2448 = vpop.f32.mrb[0].mxu0
      %v2449 = vpop.f32.mrb[0].mxu0
      %v2450 = vadd.f32 %v2242, %v2449
      %v2451 = vpop.f32.mrb[0].mxu0
      %2452 = vdwg.mxu0
      %vm2453 = vcmask 31744
      %2454 = vst.msk [vmem:[%s261] sm:$0xff] %vm2453, %v2327
      %2455 = vst.msk [vmem:[%s261 + $0x8] sm:$0xff] %vm2453, %v2330
      %2456 = vst.msk [vmem:[%s261 + $0x10] sm:$0xff] %vm2453, %v2335
      %2457 = vst.msk [vmem:[%s261 + $0x18] sm:$0xff] %vm2453, %v2338
      %2458 = vst.msk [vmem:[%s261 + $0x20] sm:$0xff] %vm2453, %v2343
      %2459 = vst.msk [vmem:[%s261 + $0x28] sm:$0xff] %vm2453, %v2346
      %2460 = vst.msk [vmem:[%s261 + $0x30] sm:$0xff] %vm2453, %v2351
      %2461 = vst.msk [vmem:[%s261 + $0x38] sm:$0xff] %vm2453, %v2354
      %2462 = vst.msk [vmem:[%s261 + $0x40] sm:$0xff] %vm2453, %v2359
      %2463 = vst.msk [vmem:[%s261 + $0x48] sm:$0xff] %vm2453, %v2362
      %2464 = vst.msk [vmem:[%s261 + $0x50] sm:$0xff] %vm2453, %v2367
      %2465 = vst.msk [vmem:[%s261 + $0x58] sm:$0xff] %vm2453, %v2370
      %2466 = vst.msk [vmem:[%s261 + $0x60] sm:$0xff] %vm2453, %v2375
      %2467 = vst.msk [vmem:[%s261 + $0x68] sm:$0xff] %vm2453, %v2378
      %2468 = vst.msk [vmem:[%s261 + $0x70] sm:$0xff] %vm2453, %v2383
      %2469 = vst.msk [vmem:[%s261 + $0x78] sm:$0xff] %vm2453, %v2386
      %2470 = vst.msk [vmem:[%s261 + $0x80] sm:$0xff] %vm2453, %v2391
      %2471 = vst.msk [vmem:[%s261 + $0x88] sm:$0xff] %vm2453, %v2394
      %2472 = vst.msk [vmem:[%s261 + $0x90] sm:$0xff] %vm2453, %v2399
      %2473 = vst.msk [vmem:[%s261 + $0x98] sm:$0xff] %vm2453, %v2402
      %2474 = vst.msk [vmem:[%s261 + $0xa0] sm:$0xff] %vm2453, %v2407
      %2475 = vst.msk [vmem:[%s261 + $0xa8] sm:$0xff] %vm2453, %v2410
      %2476 = vst.msk [vmem:[%s261 + $0xb0] sm:$0xff] %vm2453, %v2415
      %2477 = vst.msk [vmem:[%s261 + $0xb8] sm:$0xff] %vm2453, %v2418
      %2478 = vst.msk [vmem:[%s261 + $0xc0] sm:$0xff] %vm2453, %v2423
      %2479 = vst.msk [vmem:[%s261 + $0xc8] sm:$0xff] %vm2453, %v2426
      %2480 = vst.msk [vmem:[%s261 + $0xd0] sm:$0xff] %vm2453, %v2431
      %2481 = vst.msk [vmem:[%s261 + $0xd8] sm:$0xff] %vm2453, %v2434
      %2482 = vst.msk [vmem:[%s261 + $0xe0] sm:$0xff] %vm2453, %v2439
      %2483 = vst.msk [vmem:[%s261 + $0xe8] sm:$0xff] %vm2453, %v2442
      %2484 = vst.msk [vmem:[%s261 + $0xf0] sm:$0xff] %vm2453, %v2447
      %2485 = vst.msk [vmem:[%s261 + $0xf8] sm:$0xff] %vm2453, %v2450
      %v2486 = vtanh.pop %v2327
      %v2487 = vtanh.pop %v2330
      %v2488 = vtanh.pop %v2335
      %v2489 = vtanh.pop %v2338
      %v2490 = vtanh.pop %v2343
      %v2491 = vtanh.pop %v2346
      %v2492 = vtanh.pop %v2351
      %v2493 = vtanh.pop %v2354
      %v2494 = vtanh.pop %v2359
      %v2495 = vtanh.pop %v2362
      %v2496 = vtanh.pop %v2367
      %v2497 = vtanh.pop %v2370
      %v2498 = vtanh.pop %v2375
      %v2499 = vtanh.pop %v2378
      %v2500 = vtanh.pop %v2383
      %v2501 = vtanh.pop %v2386
      %v2502 = vtanh.pop %v2391
      %v2503 = vtanh.pop %v2394
      %v2504 = vtanh.pop %v2399
      %v2505 = vtanh.pop %v2402
      %v2506 = vtanh.pop %v2407
      %v2507 = vtanh.pop %v2410
      %v2508 = vtanh.pop %v2415
      %v2509 = vtanh.pop %v2418
      %v2510 = vtanh.pop %v2423
      %v2511 = vtanh.pop %v2426
      %v2512 = vtanh.pop %v2431
      %v2513 = vtanh.pop %v2434
      %v2514 = vtanh.pop %v2439
      %v2515 = vtanh.pop %v2442
      %v2516 = vtanh.pop %v2447
      %v2517 = vtanh.pop %v2450
      %v2518 = vadd.f32 %v2486, 1.0
      %v2519 = vadd.f32 %v2487, 1.0
      %v2520 = vadd.f32 %v2488, 1.0
      %v2521 = vadd.f32 %v2489, 1.0
      %v2522 = vadd.f32 %v2490, 1.0
      %v2523 = vadd.f32 %v2491, 1.0
      %v2524 = vadd.f32 %v2492, 1.0
      %v2525 = vadd.f32 %v2493, 1.0
      %v2526 = vadd.f32 %v2494, 1.0
      %v2527 = vadd.f32 %v2495, 1.0
      %v2528 = vadd.f32 %v2496, 1.0
      %v2529 = vadd.f32 %v2497, 1.0
      %v2530 = vadd.f32 %v2498, 1.0
      %v2531 = vadd.f32 %v2499, 1.0
      %v2532 = vadd.f32 %v2500, 1.0
      %v2533 = vadd.f32 %v2501, 1.0
      %v2534 = vadd.f32 %v2502, 1.0
      %v2535 = vadd.f32 %v2503, 1.0
      %v2536 = vadd.f32 %v2504, 1.0
      %v2537 = vadd.f32 %v2505, 1.0
      %v2538 = vadd.f32 %v2506, 1.0
      %v2539 = vadd.f32 %v2507, 1.0
      %v2540 = vadd.f32 %v2508, 1.0
      %v2541 = vadd.f32 %v2509, 1.0
      %v2542 = vadd.f32 %v2510, 1.0
      %v2543 = vadd.f32 %v2511, 1.0
      %v2544 = vadd.f32 %v2512, 1.0
      %v2545 = vadd.f32 %v2513, 1.0
      %v2546 = vadd.f32 %v2514, 1.0
      %v2547 = vadd.f32 %v2515, 1.0
      %v2548 = vadd.f32 %v2516, 1.0
      %v2549 = vadd.f32 %v2517, 1.0
      %v2550 = vmul.f32 %v2518, 3.5
      %v2551 = vmul.f32 %v2519, 3.5
      %v2552 = vmul.f32 %v2520, 3.5
      %v2553 = vmul.f32 %v2521, 3.5
      %v2554 = vmul.f32 %v2522, 3.5
      %v2555 = vmul.f32 %v2523, 3.5
      %v2556 = vmul.f32 %v2524, 3.5
      %v2557 = vmul.f32 %v2525, 3.5
      %v2558 = vmul.f32 %v2526, 3.5
      %v2559 = vmul.f32 %v2527, 3.5
      %v2560 = vmul.f32 %v2528, 3.5
      %v2561 = vmul.f32 %v2529, 3.5
      %v2562 = vmul.f32 %v2530, 3.5
      %v2563 = vmul.f32 %v2531, 3.5
      %v2564 = vmul.f32 %v2532, 3.5
      %v2565 = vmul.f32 %v2533, 3.5
      %v2566 = vmul.f32 %v2534, 3.5
      %v2567 = vmul.f32 %v2535, 3.5
      %v2568 = vmul.f32 %v2536, 3.5
      %v2569 = vmul.f32 %v2537, 3.5
      %v2570 = vmul.f32 %v2538, 3.5
      %v2571 = vmul.f32 %v2539, 3.5
      %v2572 = vmul.f32 %v2540, 3.5
      %v2573 = vmul.f32 %v2541, 3.5
      %v2574 = vmul.f32 %v2542, 3.5
      %v2575 = vmul.f32 %v2543, 3.5
      %v2576 = vmul.f32 %v2544, 3.5
      %v2577 = vmul.f32 %v2545, 3.5
      %v2578 = vmul.f32 %v2546, 3.5
      %v2579 = vmul.f32 %v2547, 3.5
      %v2580 = vmul.f32 %v2548, 3.5
      %v2581 = vmul.f32 %v2549, 3.5
      %v2582 = vadd.f32 %v2550, -5.0
      %v2583 = vadd.f32 %v2551, -5.0
      %v2584 = vadd.f32 %v2552, -5.0
      %v2585 = vadd.f32 %v2553, -5.0
      %v2586 = vadd.f32 %v2554, -5.0
      %v2587 = vadd.f32 %v2555, -5.0
      %v2588 = vadd.f32 %v2556, -5.0
      %v2589 = vadd.f32 %v2557, -5.0
      %v2590 = vadd.f32 %v2558, -5.0
      %v2591 = vadd.f32 %v2559, -5.0
      %v2592 = vadd.f32 %v2560, -5.0
      %v2593 = vadd.f32 %v2561, -5.0
      %v2594 = vadd.f32 %v2562, -5.0
      %v2595 = vadd.f32 %v2563, -5.0
      %v2596 = vadd.f32 %v2564, -5.0
      %v2597 = vadd.f32 %v2565, -5.0
      %v2598 = vadd.f32 %v2566, -5.0
      %v2599 = vadd.f32 %v2567, -5.0
      %v2600 = vadd.f32 %v2568, -5.0
      %v2601 = vadd.f32 %v2569, -5.0
      %v2602 = vadd.f32 %v2570, -5.0
      %v2603 = vadd.f32 %v2571, -5.0
      %v2604 = vadd.f32 %v2572, -5.0
      %v2605 = vadd.f32 %v2573, -5.0
      %v2606 = vadd.f32 %v2574, -5.0
      %v2607 = vadd.f32 %v2575, -5.0
      %v2608 = vadd.f32 %v2576, -5.0
      %v2609 = vadd.f32 %v2577, -5.0
      %v2610 = vadd.f32 %v2578, -5.0
      %v2611 = vadd.f32 %v2579, -5.0
      %v2612 = vadd.f32 %v2580, -5.0
      %v2613 = vadd.f32 %v2581, -5.0
      %2646 = vrot.lane.b32.xlu0 %v2582, 124
      %v2647 = vpop.permute.xlu0 %2646
      %2648 = vrot.lane.b32.xlu0 %v2583, 124
      %v2649 = vpop.permute.xlu0 %2648
      %2650 = vrot.lane.b32.xlu0 %v2584, 124
      %v2651 = vpop.permute.xlu0 %2650
      %2652 = vrot.lane.b32.xlu0 %v2585, 124
      %v2653 = vpop.permute.xlu0 %2652
      %2654 = vrot.lane.b32.xlu0 %v2586, 124
      %v2655 = vpop.permute.xlu0 %2654
      %2656 = vrot.lane.b32.xlu0 %v2587, 124
      %v2657 = vpop.permute.xlu0 %2656
      %2658 = vrot.lane.b32.xlu0 %v2588, 124
      %v2659 = vpop.permute.xlu0 %2658
      %2660 = vrot.lane.b32.xlu0 %v2589, 124
      %v2661 = vpop.permute.xlu0 %2660
      %2662 = vrot.lane.b32.xlu0 %v2590, 124
      %v2663 = vpop.permute.xlu0 %2662
      %2664 = vrot.lane.b32.xlu0 %v2591, 124
      %v2665 = vpop.permute.xlu0 %2664
      %2666 = vrot.lane.b32.xlu0 %v2592, 124
      %v2667 = vpop.permute.xlu0 %2666
      %2668 = vrot.lane.b32.xlu0 %v2593, 124
      %v2669 = vpop.permute.xlu0 %2668
      %2670 = vrot.lane.b32.xlu0 %v2594, 124
      %v2671 = vpop.permute.xlu0 %2670
      %2672 = vrot.lane.b32.xlu0 %v2595, 124
      %v2673 = vpop.permute.xlu0 %2672
      %2674 = vrot.lane.b32.xlu0 %v2596, 124
      %v2675 = vpop.permute.xlu0 %2674
      %2676 = vrot.lane.b32.xlu0 %v2597, 124
      %v2677 = vpop.permute.xlu0 %2676
      %2678 = vrot.lane.b32.xlu0 %v2598, 124
      %v2679 = vpop.permute.xlu0 %2678
      %2680 = vrot.lane.b32.xlu0 %v2599, 124
      %v2681 = vpop.permute.xlu0 %2680
      %2682 = vrot.lane.b32.xlu0 %v2600, 124
      %v2683 = vpop.permute.xlu0 %2682
      %2684 = vrot.lane.b32.xlu0 %v2601, 124
      %v2685 = vpop.permute.xlu0 %2684
      %2686 = vrot.lane.b32.xlu0 %v2602, 124
      %v2687 = vpop.permute.xlu0 %2686
      %2688 = vrot.lane.b32.xlu0 %v2603, 124
      %v2689 = vpop.permute.xlu0 %2688
      %2690 = vrot.lane.b32.xlu0 %v2604, 124
      %v2691 = vpop.permute.xlu0 %2690
      %2692 = vrot.lane.b32.xlu0 %v2605, 124
      %v2693 = vpop.permute.xlu0 %2692
      %2694 = vrot.lane.b32.xlu0 %v2606, 124
      %v2695 = vpop.permute.xlu0 %2694
      %2696 = vrot.lane.b32.xlu0 %v2607, 124
      %v2697 = vpop.permute.xlu0 %2696
      %2698 = vrot.lane.b32.xlu0 %v2608, 124
      %v2699 = vpop.permute.xlu0 %2698
      %2700 = vrot.lane.b32.xlu0 %v2609, 124
      %v2701 = vpop.permute.xlu0 %2700
      %2702 = vrot.lane.b32.xlu0 %v2610, 124
      %v2703 = vpop.permute.xlu0 %2702
      %2704 = vrot.lane.b32.xlu0 %v2611, 124
      %v2705 = vpop.permute.xlu0 %2704
      %2706 = vrot.lane.b32.xlu0 %v2612, 124
      %v2707 = vpop.permute.xlu0 %2706
      %2708 = vrot.lane.b32.xlu0 %v2613, 124
      %v2709 = vpop.permute.xlu0 %2708
      %2742 = vst.msk [vmem:[%s267] sm:$0xff] %vm2453, %v2647
      %2743 = vst.msk [vmem:[%s267 + $0x8] sm:$0xff] %vm2453, %v2649
      %2744 = vst.msk [vmem:[%s267 + $0x10] sm:$0xff] %vm2453, %v2651
      %2745 = vst.msk [vmem:[%s267 + $0x18] sm:$0xff] %vm2453, %v2653
      %2746 = vst.msk [vmem:[%s267 + $0x20] sm:$0xff] %vm2453, %v2655
      %2747 = vst.msk [vmem:[%s267 + $0x28] sm:$0xff] %vm2453, %v2657
      %2748 = vst.msk [vmem:[%s267 + $0x30] sm:$0xff] %vm2453, %v2659
      %2749 = vst.msk [vmem:[%s267 + $0x38] sm:$0xff] %vm2453, %v2661
      %2750 = vst.msk [vmem:[%s267 + $0x40] sm:$0xff] %vm2453, %v2663
      %2751 = vst.msk [vmem:[%s267 + $0x48] sm:$0xff] %vm2453, %v2665
      %2752 = vst.msk [vmem:[%s267 + $0x50] sm:$0xff] %vm2453, %v2667
      %2753 = vst.msk [vmem:[%s267 + $0x58] sm:$0xff] %vm2453, %v2669
      %2754 = vst.msk [vmem:[%s267 + $0x60] sm:$0xff] %vm2453, %v2671
      %2755 = vst.msk [vmem:[%s267 + $0x68] sm:$0xff] %vm2453, %v2673
      %2756 = vst.msk [vmem:[%s267 + $0x70] sm:$0xff] %vm2453, %v2675
      %2757 = vst.msk [vmem:[%s267 + $0x78] sm:$0xff] %vm2453, %v2677
      %2758 = vst.msk [vmem:[%s267 + $0x80] sm:$0xff] %vm2453, %v2679
      %2759 = vst.msk [vmem:[%s267 + $0x88] sm:$0xff] %vm2453, %v2681
      %2760 = vst.msk [vmem:[%s267 + $0x90] sm:$0xff] %vm2453, %v2683
      %2761 = vst.msk [vmem:[%s267 + $0x98] sm:$0xff] %vm2453, %v2685
      %2762 = vst.msk [vmem:[%s267 + $0xa0] sm:$0xff] %vm2453, %v2687
      %2763 = vst.msk [vmem:[%s267 + $0xa8] sm:$0xff] %vm2453, %v2689
      %2764 = vst.msk [vmem:[%s267 + $0xb0] sm:$0xff] %vm2453, %v2691
      %2765 = vst.msk [vmem:[%s267 + $0xb8] sm:$0xff] %vm2453, %v2693
      %2766 = vst.msk [vmem:[%s267 + $0xc0] sm:$0xff] %vm2453, %v2695
      %2767 = vst.msk [vmem:[%s267 + $0xc8] sm:$0xff] %vm2453, %v2697
      %2768 = vst.msk [vmem:[%s267 + $0xd0] sm:$0xff] %vm2453, %v2699
      %2769 = vst.msk [vmem:[%s267 + $0xd8] sm:$0xff] %vm2453, %v2701
      %2770 = vst.msk [vmem:[%s267 + $0xe0] sm:$0xff] %vm2453, %v2703
      %2771 = vst.msk [vmem:[%s267 + $0xe8] sm:$0xff] %vm2453, %v2705
      %2772 = vst.msk [vmem:[%s267 + $0xf0] sm:$0xff] %vm2453, %v2707
      %2773 = vst.msk [vmem:[%s267 + $0xf8] sm:$0xff] %vm2453, %v2709
      %s2774 = smul.u32 32, %s18
      %p2775 = scmp.lt.s32.totalorder %s2774, 63
      %s2776 = scalar_select %p2775, %s2774, 63
      %s2777 = smul.addr %s2776, 8
      %s2778 = scalar_lea.vmem %s5, %s2777
      %s2779 = smul.u32 32, %s18
      %p2780 = scmp.lt.s32.totalorder %s2779, 63
      %s2781 = scalar_select %p2780, %s2779, 63
      %s2782 = smul.addr %s2781, 8
      %s2783 = scalar_lea.vmem %s6, %s2782
      // Predicated region
      $region41: #{actor_adapter_features_forward.1} parent=39 // pred_check
        %p2784 = pneg %p146
      $region42: #{actor_adapter_features_forward.1} parent=39 // pred_check_branch
        %2786 = sbr.rel (%p2784) target = $region44
      $region43: #{actor_adapter_features_forward.1} parent=39 // pred_region
        %s2787 = smul.u32 32, %s18
      $region44: #{actor_adapter_features_forward.1} parent=39 // pred_fallthru
        _
      // Predicated region
      $region45: #{actor_adapter_features_forward.1} parent=39 // pred_check
        %p2788 = pneg %p172
      $region46: #{actor_adapter_features_forward.1} parent=39 // pred_check_branch
        %2790 = sbr.rel (%p2788) target = $region48
      $region47: #{actor_adapter_features_forward.1} parent=39 // pred_region
        %s2791 = smul.u32 32, %s18
      $region48: #{actor_adapter_features_forward.1} parent=39 // pred_fallthru
        _
    $region40: #{actor_adapter_features_forward.1} parent=5 // pred_fallthru
      _
    %p2792 = scmp.le.s32.totalorder 2, %s13
    // Predicated region
    $region49: #{actor_adapter_features_forward.1} parent=5 // pred_check
      %p2793 = pneg %p2792
    $region50: #{actor_adapter_features_forward.1} parent=5 // pred_check_branch
      %2795 = sbr.rel (%p2793) target = $region52
    $region51: #{actor_adapter_features_forward.1} parent=5 // pred_region
      %s2796 = ssub.s32 %s13, 2
      // Predicated region
      $region53: #{actor_adapter_features_forward.1} parent=51 // pred_check
        %p2797 = pneg %p152
      $region54: #{actor_adapter_features_forward.1} parent=51 // pred_check_branch
        %2799 = sbr.rel (%p2797) target = $region56
      $region55: #{actor_adapter_features_forward.1} parent=51 // pred_region
        %s2800 = smul.u32 32, %s19
        %p2801 = scmp.lt.s32.totalorder %s2800, 63
        %s2802 = scalar_select %p2801, %s2800, 63
        %s2803 = smul.addr %s2802, 8
        %s2804 = scalar_lea.vmem %s5, %s2803
      $region56: #{actor_adapter_features_forward.1} parent=51 // pred_fallthru
        _
      // Predicated region
      $region57: #{actor_adapter_features_forward.1} parent=51 // pred_check
        %p2805 = pneg %p178
      $region58: #{actor_adapter_features_forward.1} parent=51 // pred_check_branch
        %2807 = sbr.rel (%p2805) target = $region60
      $region59: #{actor_adapter_features_forward.1} parent=51 // pred_region
        %s2808 = smul.u32 32, %s19
        %p2809 = scmp.lt.s32.totalorder %s2808, 63
        %s2810 = scalar_select %p2809, %s2808, 63
        %s2811 = smul.addr %s2810, 8
        %s2812 = scalar_lea.vmem %s6, %s2811
      $region60: #{actor_adapter_features_forward.1} parent=51 // pred_fallthru
        _
    $region52: #{actor_adapter_features_forward.1} parent=5 // pred_fallthru
      _
  $region6: #{actor_adapter_features_forward.1} parent=0 // loop_footer
    %s17 = sadd.s32 1, %s13
  $region7: #{actor_adapter_features_forward.1} parent=0 // loop_footer_branch
    %12 = sbr.rel target = $region3
  $region8: #{actor_adapter_features_forward.1} parent=0 // loop_exit
    _

</llo_original>
